<compile_context>
chip_gen: v6e
topology: v6e:2x2x1
jax: 0.10.0
libtpu: 0.0.40
codegen_flags: <defaults>
</compile_context>

<pallas_src>
from functools import partial

import jax
import jax.numpy as jnp
from jax import lax
from jax.experimental import pallas as pl
from jax.experimental.pallas import tpu as pltpu


def down_block_kernel(x_ref, a1_ref, b1_ref, a2_ref, b2_ref, o_ref,
                      *, Hp, Wp, use_xlu_roll):
    # x_ref:  (1, 4, Cin, P) bf16   4 pool-window taps, channel-major, P=Hp*Wp
    # a1_ref: (3, Cout, 3*Cin) bf16 conv1 weights grouped by kernel row dy
    # b1_ref: (Cout, 1)  f32
    # a2_ref: (3, Cout, 3*Cout) bf16
    # b2_ref: (Cout, 1)  f32
    # o_ref:  (1, Cout, P) f32      NCHW-flat output (lane-dense store)
    P = Hp * Wp

    # ---- MaxPool2d(2): elementwise max over the 4 pre-split window taps ----
    # (bf16 -> f32 upcast is exact; keeps all VALU math in f32, v5e-friendly.)
    pooled = jnp.maximum(
        jnp.maximum(x_ref[0, 0].astype(jnp.float32),
                    x_ref[0, 1].astype(jnp.float32)),
        jnp.maximum(x_ref[0, 2].astype(jnp.float32),
                    x_ref[0, 3].astype(jnp.float32)))            # (Cin, P)

    # Flattened-pixel coordinates along the lane axis, for the 3x3 edge masks.
    pos = lax.broadcasted_iota(jnp.int32, (1, P), 1)
    xx = pos % Wp
    up_ok = pos >= Wp                  # source row y-1 is inside the image
    down_ok = pos < (Hp - 1) * Wp      # source row y+1 is inside the image
    left_ok = xx >= 1                  # source col x-1 is inside the image
    right_ok = xx < Wp - 1             # source col x+1 is inside the image

    def lane_roll(v, shift):
        # XLU rotate when available; jnp.roll fallback is bit-identical.
        if use_xlu_roll:
            return pltpu.roll(v, shift, axis=1)
        return jnp.roll(v, shift, axis=1)

    def conv3x3_relu(flat, a_ref, b_ref):
        """'Same'-padded 3x3 conv + ReLU on a channel-major (C, P) slab.

        im2col-by-rotation invariant (keep in sync if this is ever re-tiled):
        tap (dy, dx) at output pixel p needs flat[:, p + s] with
        s = (dy-1)*Wp + (dx-1).  Rolling `flat` by (-s) % P along lanes places
        flat[:, p + s] at lane p; every lane whose shifted source wrapped
        around P or crossed a row boundary is exactly a lane whose true source
        pixel lies outside the image, and those lanes are zeroed by the
        up/down/left/right masks above.
        """
        acc = None
        for dy in range(3):
            # One (3C, P) kernel-row group per dy; splitting the K=9C
            # contraction into 3 accumulating K=3C matmuls keeps the largest
            # live im2col value 3x smaller (VMEM headroom at large C on v7x).
            group = []
            for dx in range(3):
                s = (dy - 1) * Wp + (dx - 1)
                tap = flat if s == 0 else lane_roll(flat, (-s) % P)
                valid = None
                if dy == 0:
                    valid = up_ok
                elif dy == 2:
                    valid = down_ok
                if dx == 0:
                    valid = left_ok if valid is None else jnp.logical_and(valid, left_ok)
                elif dx == 2:
                    valid = right_ok if valid is None else jnp.logical_and(valid, right_ok)
                if valid is not None:
                    tap = jnp.where(valid, tap, 0.0)
                group.append(tap)
            col = jnp.concatenate(group, axis=0).astype(jnp.bfloat16)   # (3C, P)
            # bf16 x bf16 MXU matmul with f32 accumulation.  Orientation
            # (M=Cout, N=P) keeps the result store lane-dense; fine while Cout
            # is the small dimension.
            part = jnp.dot(a_ref[dy], col, preferred_element_type=jnp.float32)
            acc = part if acc is None else acc + part
        return jnp.maximum(acc + b_ref[...], 0.0)                        # (Cout, P)

    h1 = conv3x3_relu(pooled, a1_ref, b1_ref)    # (Cout, P) f32
    h2 = conv3x3_relu(h1, a2_ref, b2_ref)        # (Cout, P) f32

    # Lane-dense store: last dim is the full flattened spatial extent, already
    # in NCHW order -> no masked partial stores, no output transpose.
    o_ref[...] = h2[None].astype(o_ref.dtype)


_XLU_ROLL_OK = None


def _xlu_roll_ok():
    """Probe pltpu.roll once: it must lower on this jax/libtpu combo and match
    jnp.roll semantics; otherwise the kernel uses the jnp.roll fallback."""
    global _XLU_ROLL_OK
    if _XLU_ROLL_OK is None:
        try:
            def k(x_ref, o_ref):
                o_ref[...] = pltpu.roll(x_ref[...], 3, axis=1)
            x = jnp.arange(8 * 256, dtype=jnp.float32).reshape(8, 256)
            got = pl.pallas_call(
                k, out_shape=jax.ShapeDtypeStruct((8, 256), jnp.float32))(x)
            _XLU_ROLL_OK = bool(jnp.array_equal(got, jnp.roll(x, 3, axis=1)))
        except Exception:
            _XLU_ROLL_OK = False
    return _XLU_ROLL_OK


def down_block_pallas(x_nchw, w1_oihw, b1, w2_oihw, b2):
    """x_nchw: (N, Cin, H, W) f32; weights in PyTorch OIHW layout. Returns NCHW f32."""
    N, Cin, H, W = x_nchw.shape
    Cout = w1_oihw.shape[0]
    assert H % 2 == 0 and W % 2 == 0, "MaxPool2d(2) requires even H and W"
    Hp, Wp = H // 2, W // 2
    P = Hp * Wp

    # 2x2 pool-window de-interleave (pure index permutation) with the f32->bf16
    # cast fused into it -- the only wrapper-side HBM pass, now half the bytes.
    # (bf16 rounding is monotone, so max over bf16 taps == bf16(max over f32).)
    taps = (x_nchw.astype(jnp.bfloat16)
            .reshape(N, Cin, Hp, 2, Wp, 2)
            .transpose(0, 3, 5, 1, 2, 4)
            .reshape(N, 4, Cin, P))
    # TODO(synk): fold the max-pool into the kernel (stride-2 ref reads of the
    # raw NCHW block) to remove this extra HBM read+write of the input.

    # Conv weights grouped by kernel row: a[dy, co, dx*C + ci] = w[co, ci, dy, dx].
    a1 = jnp.transpose(w1_oihw, (2, 0, 3, 1)).reshape(3, Cout, 3 * Cin)
    a2 = jnp.transpose(w2_oihw, (2, 0, 3, 1)).reshape(3, Cout, 3 * Cout)
    a1 = a1.astype(jnp.bfloat16)
    a2 = a2.astype(jnp.bfloat16)
    b1c = b1.reshape(Cout, 1).astype(jnp.float32)
    b2c = b2.reshape(Cout, 1).astype(jnp.float32)

    kernel = partial(down_block_kernel, Hp=Hp, Wp=Wp,
                     use_xlu_roll=_xlu_roll_ok())

    # TODO(synk): for production UNet tiles (Hp = Wp >= 128, C >= 64) add a
    # spatial row-tile grid axis with a 2-row halo (manual DMA of halo rows)
    # so the per-step working set fits v7x's 64 MiB VMEM and DMA/compute
    # overlap is preserved; size tiles to ~1/4-1/2 of VMEM.
    out_flat = pl.pallas_call(
        kernel,
        out_shape=jax.ShapeDtypeStruct((N, Cout, P), jnp.float32),
        grid_spec=pltpu.PrefetchScalarGridSpec(
            num_scalar_prefetch=0,
            grid=(N,),
            in_specs=[
                pl.BlockSpec((1, 4, Cin, P), lambda n: (n, 0, 0, 0)),
                # Constant-index weight/bias blocks.  (pipeline_mode=
                # pl.Buffered(1) would drop their double buffer; skipped --
                # negligible VMEM here and support varies across versions.)
                pl.BlockSpec((3, Cout, 3 * Cin), lambda n: (0, 0, 0)),
                pl.BlockSpec((Cout, 1), lambda n: (0, 0)),
                pl.BlockSpec((3, Cout, 3 * Cout), lambda n: (0, 0, 0)),
                pl.BlockSpec((Cout, 1), lambda n: (0, 0)),
            ],
            out_specs=pl.BlockSpec((1, Cout, P), lambda n: (n, 0, 0)),
        ),
        compiler_params=pltpu.CompilerParams(
            dimension_semantics=("parallel",),   # batch items are independent
            vmem_limit_bytes=64 * 1024 * 1024,   # headroom over default scoped limit
        ),
    )(taps, a1, b1c, a2, b2c)

    return out_flat.reshape(N, Cout, Hp, Wp)


def ref_forward(x, w1, b1, w2, b2):
    """Pure-JAX f32 reference matching PyTorch DownBlock semantics (NCHW)."""
    N, C, H, W = x.shape
    p = x.reshape(N, C, H // 2, 2, W // 2, 2).max(axis=(3, 5))

    def conv_relu(inp, w, b):
        o = lax.conv_general_dilated(
            inp, w, window_strides=(1, 1), padding=((1, 1), (1, 1)),
            dimension_numbers=("NCHW", "OIHW", "NCHW"))
        return jnp.maximum(o + b[None, :, None, None], 0.0)

    return conv_relu(conv_relu(p, w1, b1), w2, b2)


if __name__ == "__main__":
    # Small but lane/sublane-aligned shapes (review: P multiple of 128, C a
    # multiple of 8): pooled spatial = 16x16 -> P = 256 lanes per store.
    N, Cin, Cout, H, W = 2, 8, 16, 32, 32

    key = jax.random.PRNGKey(0)
    k1, k2, k3, k4, k5 = jax.random.split(key, 5)
    x = jax.random.normal(k1, (N, Cin, H, W), jnp.float32)
    w1 = jax.random.normal(k2, (Cout, Cin, 3, 3), jnp.float32) * 0.1
    b1 = jax.random.normal(k3, (Cout,), jnp.float32) * 0.1
    w2 = jax.random.normal(k4, (Cout, Cout, 3, 3), jnp.float32) * 0.1
    b2 = jax.random.normal(k5, (Cout,), jnp.float32) * 0.1

    out = jax.block_until_ready(down_block_pallas(x, w1, b1, w2, b2))

    ref = ref_forward(x, w1, b1, w2, b2)
    assert out.shape == ref.shape, (out.shape, ref.shape)
    max_err = float(jnp.max(jnp.abs(out - ref)))
    # bf16 activations / weights on the MXU (f32 accumulation) vs f32 reference.
    assert jnp.allclose(out, ref, atol=3e-2, rtol=3e-2), max_err

    print("KERNEL_OK")
</pallas_src>

<mosaic_0001>
module attributes {stable_mosaic.version = 11 : i64} {
  func.func @k(%arg0: memref<8x256xf32, #tpu.memory_space<vmem>>, %arg1: memref<8x256xf32, #tpu.memory_space<vmem>>) attributes {dimension_semantics = [], scalar_prefetch = 0 : i64, scratch_operands = 0 : i64, tpu.core_type = #tpu.core_type<tc>} {
    %c0 = arith.constant 0 : index
    %c0_0 = arith.constant 0 : index
    %0 = vector.load %arg0[%c0, %c0_0] : memref<8x256xf32, #tpu.memory_space<vmem>>, vector<8x256xf32>
    %c3_i32 = arith.constant 3 : i32
    %1 = tpu.dynamic_rotate %0 by %c3_i32 dim 1 : vector<8x256xf32>, i32 -> vector<8x256xf32>
    %c0_1 = arith.constant 0 : index
    %c0_2 = arith.constant 0 : index
    %2 = vector.load %arg1[%c0_1, %c0_2] : memref<8x256xf32, #tpu.memory_space<vmem>>, vector<8x256xf32>
    tpu.vector_store %arg1[%c0_1, %c0_2], %1 {strides = array<i32>} : memref<8x256xf32, #tpu.memory_space<vmem>>, vector<8x256xf32>,
    return
  }
}

module attributes {stable_mosaic.version = 11 : i64} {
  func.func @down_block_kernel(%arg0: i32, %arg1: memref<1x4x8x256xbf16, #tpu.memory_space<vmem>>, %arg2: memref<3x16x24xbf16, #tpu.memory_space<vmem>>, %arg3: memref<16x1xf32, #tpu.memory_space<vmem>>, %arg4: memref<3x16x48xbf16, #tpu.memory_space<vmem>>, %arg5: memref<16x1xf32, #tpu.memory_space<vmem>>, %arg6: memref<1x16x256xf32, #tpu.memory_space<vmem>>) attributes {dimension_semantics = [#tpu.dimension_semantics<parallel>], iteration_bounds = array<i64: 2>, scalar_prefetch = 0 : i64, scratch_operands = 0 : i64, tpu.core_type = #tpu.core_type<tc>, window_params = [{transform_indices = @transform_0, window_bounds = array<i64: 1, 4, 8, 256>}, {pipeline_mode = #tpu.pipeline_mode<synchronous>, transform_indices = @transform_1, window_bounds = array<i64: 3, 16, 24>}, {pipeline_mode = #tpu.pipeline_mode<synchronous>, transform_indices = @transform_2, window_bounds = array<i64: 16, 1>}, {pipeline_mode = #tpu.pipeline_mode<synchronous>, transform_indices = @transform_3, window_bounds = array<i64: 3, 16, 48>}, {pipeline_mode = #tpu.pipeline_mode<synchronous>, transform_indices = @transform_4, window_bounds = array<i64: 16, 1>}, {transform_indices = @transform_5, window_bounds = array<i64: 1, 16, 256>}]} {
    %c0 = arith.constant 0 : index
    %c0_0 = arith.constant 0 : index
    %c0_1 = arith.constant 0 : index
    %c0_2 = arith.constant 0 : index
    %0 = vector.load %arg1[%c0, %c0_0, %c0_1, %c0_2] : memref<1x4x8x256xbf16, #tpu.memory_space<vmem>>, vector<1x1x8x256xbf16>
    %1 = vector.shape_cast %0 : vector<1x1x8x256xbf16> to vector<8x256xbf16>
    %2 = arith.extf %1 : vector<8x256xbf16> to vector<8x256xf32>
    %c0_3 = arith.constant 0 : index
    %c1 = arith.constant 1 : index
    %c0_4 = arith.constant 0 : index
    %c0_5 = arith.constant 0 : index
    %3 = vector.load %arg1[%c0_3, %c1, %c0_4, %c0_5] : memref<1x4x8x256xbf16, #tpu.memory_space<vmem>>, vector<1x1x8x256xbf16>
    %4 = vector.shape_cast %3 : vector<1x1x8x256xbf16> to vector<8x256xbf16>
    %5 = arith.extf %4 : vector<8x256xbf16> to vector<8x256xf32>
    %6 = arith.maximumf %2, %5 : vector<8x256xf32>
    %c0_6 = arith.constant 0 : index
    %c2 = arith.constant 2 : index
    %c0_7 = arith.constant 0 : index
    %c0_8 = arith.constant 0 : index
    %7 = vector.load %arg1[%c0_6, %c2, %c0_7, %c0_8] : memref<1x4x8x256xbf16, #tpu.memory_space<vmem>>, vector<1x1x8x256xbf16>
    %8 = vector.shape_cast %7 : vector<1x1x8x256xbf16> to vector<8x256xbf16>
    %9 = arith.extf %8 : vector<8x256xbf16> to vector<8x256xf32>
    %c0_9 = arith.constant 0 : index
    %c3 = arith.constant 3 : index
    %c0_10 = arith.constant 0 : index
    %c0_11 = arith.constant 0 : index
    %10 = vector.load %arg1[%c0_9, %c3, %c0_10, %c0_11] : memref<1x4x8x256xbf16, #tpu.memory_space<vmem>>, vector<1x1x8x256xbf16>
    %11 = vector.shape_cast %10 : vector<1x1x8x256xbf16> to vector<8x256xbf16>
    %12 = arith.extf %11 : vector<8x256xbf16> to vector<8x256xf32>
    %13 = arith.maximumf %9, %12 : vector<8x256xf32>
    %14 = arith.maximumf %6, %13 : vector<8x256xf32>
    %15 = tpu.iota {dimensions = array<i32: 1>} : vector<1x256xi32>
    %c16_i32 = arith.constant 16 : i32
    %c0_i32 = arith.constant 0 : i32
    %16 = arith.cmpi eq, %c16_i32, %c0_i32 : i32
    %c1_i32 = arith.constant 1 : i32
    %17 = arith.select %16, %c1_i32, %c16_i32 : i32
    %18 = vector.broadcast %17 : i32 to vector<1x256xi32>
    %19 = arith.remsi %15, %18 : vector<1x256xi32>
    %c0_i32_12 = arith.constant 0 : i32
    %20 = vector.broadcast %c0_i32_12 : i32 to vector<1x256xi32>
    %21 = arith.cmpi ne, %19, %20 : vector<1x256xi32>
    %c0_i32_13 = arith.constant 0 : i32
    %22 = vector.broadcast %c0_i32_13 : i32 to vector<1x256xi32>
    %23 = arith.cmpi slt, %19, %22 : vector<1x256xi32>
    %c0_i32_14 = arith.constant 0 : i32
    %24 = arith.cmpi slt, %17, %c0_i32_14 : i32
    %25 = vector.broadcast %24 : i1 to vector<1x256xi1>
    %26 = vector.broadcast %25 : vector<1x256xi1> to vector<1x256xi1>
    %27 = arith.xori %23, %26 : vector<1x256xi1>
    %28 = arith.andi %27, %21 : vector<1x256xi1>
    %29 = vector.broadcast %17 : i32 to vector<1x256xi32>
    %30 = arith.addi %19, %29 : vector<1x256xi32>
    %31 = arith.select %28, %30, %19 : vector<1x256xi1>, vector<1x256xi32>
    %c16_i32_15 = arith.constant 16 : i32
    %32 = vector.broadcast %c16_i32_15 : i32 to vector<1x256xi32>
    %33 = arith.cmpi sge, %15, %32 : vector<1x256xi32>
    %c240_i32 = arith.constant 240 : i32
    %34 = vector.broadcast %c240_i32 : i32 to vector<1x256xi32>
    %35 = arith.cmpi slt, %15, %34 : vector<1x256xi32>
    %c1_i32_16 = arith.constant 1 : i32
    %36 = vector.broadcast %c1_i32_16 : i32 to vector<1x256xi32>
    %37 = arith.cmpi sge, %31, %36 : vector<1x256xi32>
    %c15_i32 = arith.constant 15 : i32
    %38 = vector.broadcast %c15_i32 : i32 to vector<1x256xi32>
    %39 = arith.cmpi slt, %31, %38 : vector<1x256xi32>
    %40 = vector.extract_strided_slice %14 {offsets = [0, 239], sizes = [8, 17], strides = [1, 1]} : vector<8x256xf32> to vector<8x17xf32>
    %41 = vector.extract_strided_slice %14 {offsets = [0, 0], sizes = [8, 239], strides = [1, 1]} : vector<8x256xf32> to vector<8x239xf32>
    %42 = tpu.concatenate %40, %41 in 1 : vector<8x17xf32>, vector<8x239xf32> -> vector<8x256xf32>
    %43 = arith.andi %33, %37 : vector<1x256xi1>
    %cst = arith.constant 0.000000e+00 : f32
    %44 = vector.shape_cast %43 : vector<1x256xi1> to vector<1x256xi1>
    %45 = vector.broadcast %44 : vector<1x256xi1> to vector<8x256xi1>
    %46 = vector.broadcast %cst : f32 to vector<8x256xf32>
    %47 = arith.select %45, %42, %46 : vector<8x256xi1>, vector<8x256xf32>
    %48 = vector.extract_strided_slice %14 {offsets = [0, 240], sizes = [8, 16], strides = [1, 1]} : vector<8x256xf32> to vector<8x16xf32>
    %49 = vector.extract_strided_slice %14 {offsets = [0, 0], sizes = [8, 240], strides = [1, 1]} : vector<8x256xf32> to vector<8x240xf32>
    %50 = tpu.concatenate %48, %49 in 1 : vector<8x16xf32>, vector<8x240xf32> -> vector<8x256xf32>
    %cst_17 = arith.constant 0.000000e+00 : f32
    %51 = vector.shape_cast %33 : vector<1x256xi1> to vector<1x256xi1>
    %52 = vector.broadcast %51 : vector<1x256xi1> to vector<8x256xi1>
    %53 = vector.broadcast %cst_17 : f32 to vector<8x256xf32>
    %54 = arith.select %52, %50, %53 : vector<8x256xi1>, vector<8x256xf32>
    %55 = vector.extract_strided_slice %14 {offsets = [0, 241], sizes = [8, 15], strides = [1, 1]} : vector<8x256xf32> to vector<8x15xf32>
    %56 = vector.extract_strided_slice %14 {offsets = [0, 0], sizes = [8, 241], strides = [1, 1]} : vector<8x256xf32> to vector<8x241xf32>
    %57 = tpu.concatenate %55, %56 in 1 : vector<8x15xf32>, vector<8x241xf32> -> vector<8x256xf32>
    %58 = arith.andi %33, %39 : vector<1x256xi1>
    %cst_18 = arith.constant 0.000000e+00 : f32
    %59 = vector.shape_cast %58 : vector<1x256xi1> to vector<1x256xi1>
    %60 = vector.broadcast %59 : vector<1x256xi1> to vector<8x256xi1>
    %61 = vector.broadcast %cst_18 : f32 to vector<8x256xf32>
    %62 = arith.select %60, %57, %61 : vector<8x256xi1>, vector<8x256xf32>
    %63 = tpu.concatenate %47, %54, %62 in 0 : vector<8x256xf32>, vector<8x256xf32>, vector<8x256xf32> -> vector<24x256xf32>
    %64 = arith.truncf %63 : vector<24x256xf32> to vector<24x256xbf16>
    %c0_19 = arith.constant 0 : index
    %c0_20 = arith.constant 0 : index
    %c0_21 = arith.constant 0 : index
    %65 = vector.load %arg2[%c0_19, %c0_20, %c0_21] : memref<3x16x24xbf16, #tpu.memory_space<vmem>>, vector<1x16x24xbf16>
    %66 = vector.shape_cast %65 : vector<1x16x24xbf16> to vector<16x24xbf16>
    %cst_22 = arith.constant dense<0.000000e+00> : vector<16x256xf32>
    %67 = tpu.matmul %66, %64, %cst_22 {dimension_numbers = #tpu.dot_dimension_numbers<[1], [0], [0], [1], [0, 0, 1, 1], [], []>} : vector<16x24xbf16>, vector<24x256xbf16>, vector<16x256xf32> -> vector<16x256xf32>
    %68 = vector.extract_strided_slice %14 {offsets = [0, 255], sizes = [8, 1], strides = [1, 1]} : vector<8x256xf32> to vector<8x1xf32>
    %69 = vector.extract_strided_slice %14 {offsets = [0, 0], sizes = [8, 255], strides = [1, 1]} : vector<8x256xf32> to vector<8x255xf32>
    %70 = tpu.concatenate %68, %69 in 1 : vector<8x1xf32>, vector<8x255xf32> -> vector<8x256xf32>
    %cst_23 = arith.constant 0.000000e+00 : f32
    %71 = vector.shape_cast %37 : vector<1x256xi1> to vector<1x256xi1>
    %72 = vector.broadcast %71 : vector<1x256xi1> to vector<8x256xi1>
    %73 = vector.broadcast %cst_23 : f32 to vector<8x256xf32>
    %74 = arith.select %72, %70, %73 : vector<8x256xi1>, vector<8x256xf32>
    %75 = vector.extract_strided_slice %14 {offsets = [0, 1], sizes = [8, 255], strides = [1, 1]} : vector<8x256xf32> to vector<8x255xf32>
    %76 = vector.extract_strided_slice %14 {offsets = [0, 0], sizes = [8, 1], strides = [1, 1]} : vector<8x256xf32> to vector<8x1xf32>
    %77 = tpu.concatenate %75, %76 in 1 : vector<8x255xf32>, vector<8x1xf32> -> vector<8x256xf32>
    %cst_24 = arith.constant 0.000000e+00 : f32
    %78 = vector.shape_cast %39 : vector<1x256xi1> to vector<1x256xi1>
    %79 = vector.broadcast %78 : vector<1x256xi1> to vector<8x256xi1>
    %80 = vector.broadcast %cst_24 : f32 to vector<8x256xf32>
    %81 = arith.select %79, %77, %80 : vector<8x256xi1>, vector<8x256xf32>
    %82 = tpu.concatenate %74, %14, %81 in 0 : vector<8x256xf32>, vector<8x256xf32>, vector<8x256xf32> -> vector<24x256xf32>
    %83 = arith.truncf %82 : vector<24x256xf32> to vector<24x256xbf16>
    %c1_25 = arith.constant 1 : index
    %c0_26 = arith.constant 0 : index
    %c0_27 = arith.constant 0 : index
    %84 = vector.load %arg2[%c1_25, %c0_26, %c0_27] : memref<3x16x24xbf16, #tpu.memory_space<vmem>>, vector<1x16x24xbf16>
    %85 = vector.shape_cast %84 : vector<1x16x24xbf16> to vector<16x24xbf16>
    %cst_28 = arith.constant dense<0.000000e+00> : vector<16x256xf32>
    %86 = tpu.matmul %85, %83, %cst_28 {dimension_numbers = #tpu.dot_dimension_numbers<[1], [0], [0], [1], [0, 0, 1, 1], [], []>} : vector<16x24xbf16>, vector<24x256xbf16>, vector<16x256xf32> -> vector<16x256xf32>
    %87 = arith.addf %67, %86 : vector<16x256xf32>
    %88 = vector.extract_strided_slice %14 {offsets = [0, 15], sizes = [8, 241], strides = [1, 1]} : vector<8x256xf32> to vector<8x241xf32>
    %89 = vector.extract_strided_slice %14 {offsets = [0, 0], sizes = [8, 15], strides = [1, 1]} : vector<8x256xf32> to vector<8x15xf32>
    %90 = tpu.concatenate %88, %89 in 1 : vector<8x241xf32>, vector<8x15xf32> -> vector<8x256xf32>
    %91 = arith.andi %35, %37 : vector<1x256xi1>
    %cst_29 = arith.constant 0.000000e+00 : f32
    %92 = vector.shape_cast %91 : vector<1x256xi1> to vector<1x256xi1>
    %93 = vector.broadcast %92 : vector<1x256xi1> to vector<8x256xi1>
    %94 = vector.broadcast %cst_29 : f32 to vector<8x256xf32>
    %95 = arith.select %93, %90, %94 : vector<8x256xi1>, vector<8x256xf32>
    %96 = vector.extract_strided_slice %14 {offsets = [0, 16], sizes = [8, 240], strides = [1, 1]} : vector<8x256xf32> to vector<8x240xf32>
    %97 = vector.extract_strided_slice %14 {offsets = [0, 0], sizes = [8, 16], strides = [1, 1]} : vector<8x256xf32> to vector<8x16xf32>
    %98 = tpu.concatenate %96, %97 in 1 : vector<8x240xf32>, vector<8x16xf32> -> vector<8x256xf32>
    %cst_30 = arith.constant 0.000000e+00 : f32
    %99 = vector.shape_cast %35 : vector<1x256xi1> to vector<1x256xi1>
    %100 = vector.broadcast %99 : vector<1x256xi1> to vector<8x256xi1>
    %101 = vector.broadcast %cst_30 : f32 to vector<8x256xf32>
    %102 = arith.select %100, %98, %101 : vector<8x256xi1>, vector<8x256xf32>
    %103 = vector.extract_strided_slice %14 {offsets = [0, 17], sizes = [8, 239], strides = [1, 1]} : vector<8x256xf32> to vector<8x239xf32>
    %104 = vector.extract_strided_slice %14 {offsets = [0, 0], sizes = [8, 17], strides = [1, 1]} : vector<8x256xf32> to vector<8x17xf32>
    %105 = tpu.concatenate %103, %104 in 1 : vector<8x239xf32>, vector<8x17xf32> -> vector<8x256xf32>
    %106 = arith.andi %35, %39 : vector<1x256xi1>
    %cst_31 = arith.constant 0.000000e+00 : f32
    %107 = vector.shape_cast %106 : vector<1x256xi1> to vector<1x256xi1>
    %108 = vector.broadcast %107 : vector<1x256xi1> to vector<8x256xi1>
    %109 = vector.broadcast %cst_31 : f32 to vector<8x256xf32>
    %110 = arith.select %108, %105, %109 : vector<8x256xi1>, vector<8x256xf32>
    %111 = tpu.concatenate %95, %102, %110 in 0 : vector<8x256xf32>, vector<8x256xf32>, vector<8x256xf32> -> vector<24x256xf32>
    %112 = arith.truncf %111 : vector<24x256xf32> to vector<24x256xbf16>
    %c2_32 = arith.constant 2 : index
    %c0_33 = arith.constant 0 : index
    %c0_34 = arith.constant 0 : index
    %113 = vector.load %arg2[%c2_32, %c0_33, %c0_34] : memref<3x16x24xbf16, #tpu.memory_space<vmem>>, vector<1x16x24xbf16>
    %114 = vector.shape_cast %113 : vector<1x16x24xbf16> to vector<16x24xbf16>
    %cst_35 = arith.constant dense<0.000000e+00> : vector<16x256xf32>
    %115 = tpu.matmul %114, %112, %cst_35 {dimension_numbers = #tpu.dot_dimension_numbers<[1], [0], [0], [1], [0, 0, 1, 1], [], []>} : vector<16x24xbf16>, vector<24x256xbf16>, vector<16x256xf32> -> vector<16x256xf32>
    %116 = arith.addf %87, %115 : vector<16x256xf32>
    %c0_36 = arith.constant 0 : index
    %c0_37 = arith.constant 0 : index
    %117 = vector.load %arg3[%c0_36, %c0_37] : memref<16x1xf32, #tpu.memory_space<vmem>>, vector<16x1xf32>
    %118 = vector.broadcast %117 : vector<16x1xf32> to vector<16x256xf32>
    %119 = arith.addf %116, %118 : vector<16x256xf32>
    %cst_38 = arith.constant 0.000000e+00 : f32
    %120 = vector.broadcast %cst_38 : f32 to vector<16x256xf32>
    %121 = arith.maximumf %119, %120 : vector<16x256xf32>
    %122 = vector.extract_strided_slice %121 {offsets = [0, 239], sizes = [16, 17], strides = [1, 1]} : vector<16x256xf32> to vector<16x17xf32>
    %123 = vector.extract_strided_slice %121 {offsets = [0, 0], sizes = [16, 239], strides = [1, 1]} : vector<16x256xf32> to vector<16x239xf32>
    %124 = tpu.concatenate %122, %123 in 1 : vector<16x17xf32>, vector<16x239xf32> -> vector<16x256xf32>
    %125 = arith.andi %33, %37 : vector<1x256xi1>
    %cst_39 = arith.constant 0.000000e+00 : f32
    %126 = vector.shape_cast %125 : vector<1x256xi1> to vector<1x256xi1>
    %127 = vector.broadcast %126 : vector<1x256xi1> to vector<16x256xi1>
    %128 = vector.broadcast %cst_39 : f32 to vector<16x256xf32>
    %129 = arith.select %127, %124, %128 : vector<16x256xi1>, vector<16x256xf32>
    %130 = vector.extract_strided_slice %121 {offsets = [0, 240], sizes = [16, 16], strides = [1, 1]} : vector<16x256xf32> to vector<16x16xf32>
    %131 = vector.extract_strided_slice %121 {offsets = [0, 0], sizes = [16, 240], strides = [1, 1]} : vector<16x256xf32> to vector<16x240xf32>
    %132 = tpu.concatenate %130, %131 in 1 : vector<16x16xf32>, vector<16x240xf32> -> vector<16x256xf32>
    %cst_40 = arith.constant 0.000000e+00 : f32
    %133 = vector.shape_cast %33 : vector<1x256xi1> to vector<1x256xi1>
    %134 = vector.broadcast %133 : vector<1x256xi1> to vector<16x256xi1>
    %135 = vector.broadcast %cst_40 : f32 to vector<16x256xf32>
    %136 = arith.select %134, %132, %135 : vector<16x256xi1>, vector<16x256xf32>
    %137 = vector.extract_strided_slice %121 {offsets = [0, 241], sizes = [16, 15], strides = [1, 1]} : vector<16x256xf32> to vector<16x15xf32>
    %138 = vector.extract_strided_slice %121 {offsets = [0, 0], sizes = [16, 241], strides = [1, 1]} : vector<16x256xf32> to vector<16x241xf32>
    %139 = tpu.concatenate %137, %138 in 1 : vector<16x15xf32>, vector<16x241xf32> -> vector<16x256xf32>
    %140 = arith.andi %33, %39 : vector<1x256xi1>
    %cst_41 = arith.constant 0.000000e+00 : f32
    %141 = vector.shape_cast %140 : vector<1x256xi1> to vector<1x256xi1>
    %142 = vector.broadcast %141 : vector<1x256xi1> to vector<16x256xi1>
    %143 = vector.broadcast %cst_41 : f32 to vector<16x256xf32>
    %144 = arith.select %142, %139, %143 : vector<16x256xi1>, vector<16x256xf32>
    %145 = tpu.concatenate %129, %136, %144 in 0 : vector<16x256xf32>, vector<16x256xf32>, vector<16x256xf32> -> vector<48x256xf32>
    %146 = arith.truncf %145 : vector<48x256xf32> to vector<48x256xbf16>
    %c0_42 = arith.constant 0 : index
    %c0_43 = arith.constant 0 : index
    %c0_44 = arith.constant 0 : index
    %147 = vector.load %arg4[%c0_42, %c0_43, %c0_44] : memref<3x16x48xbf16, #tpu.memory_space<vmem>>, vector<1x16x48xbf16>
    %148 = vector.shape_cast %147 : vector<1x16x48xbf16> to vector<16x48xbf16>
    %cst_45 = arith.constant dense<0.000000e+00> : vector<16x256xf32>
    %149 = tpu.matmul %148, %146, %cst_45 {dimension_numbers = #tpu.dot_dimension_numbers<[1], [0], [0], [1], [0, 0, 1, 1], [], []>} : vector<16x48xbf16>, vector<48x256xbf16>, vector<16x256xf32> -> vector<16x256xf32>
    %150 = vector.extract_strided_slice %121 {offsets = [0, 255], sizes = [16, 1], strides = [1, 1]} : vector<16x256xf32> to vector<16x1xf32>
    %151 = vector.extract_strided_slice %121 {offsets = [0, 0], sizes = [16, 255], strides = [1, 1]} : vector<16x256xf32> to vector<16x255xf32>
    %152 = tpu.concatenate %150, %151 in 1 : vector<16x1xf32>, vector<16x255xf32> -> vector<16x256xf32>
    %cst_46 = arith.constant 0.000000e+00 : f32
    %153 = vector.shape_cast %37 : vector<1x256xi1> to vector<1x256xi1>
    %154 = vector.broadcast %153 : vector<1x256xi1> to vector<16x256xi1>
    %155 = vector.broadcast %cst_46 : f32 to vector<16x256xf32>
    %156 = arith.select %154, %152, %155 : vector<16x256xi1>, vector<16x256xf32>
    %157 = vector.extract_strided_slice %121 {offsets = [0, 1], sizes = [16, 255], strides = [1, 1]} : vector<16x256xf32> to vector<16x255xf32>
    %158 = vector.extract_strided_slice %121 {offsets = [0, 0], sizes = [16, 1], strides = [1, 1]} : vector<16x256xf32> to vector<16x1xf32>
    %159 = tpu.concatenate %157, %158 in 1 : vector<16x255xf32>, vector<16x1xf32> -> vector<16x256xf32>
    %cst_47 = arith.constant 0.000000e+00 : f32
    %160 = vector.shape_cast %39 : vector<1x256xi1> to vector<1x256xi1>
    %161 = vector.broadcast %160 : vector<1x256xi1> to vector<16x256xi1>
    %162 = vector.broadcast %cst_47 : f32 to vector<16x256xf32>
    %163 = arith.select %161, %159, %162 : vector<16x256xi1>, vector<16x256xf32>
    %164 = tpu.concatenate %156, %121, %163 in 0 : vector<16x256xf32>, vector<16x256xf32>, vector<16x256xf32> -> vector<48x256xf32>
    %165 = arith.truncf %164 : vector<48x256xf32> to vector<48x256xbf16>
    %c1_48 = arith.constant 1 : index
    %c0_49 = arith.constant 0 : index
    %c0_50 = arith.constant 0 : index
    %166 = vector.load %arg4[%c1_48, %c0_49, %c0_50] : memref<3x16x48xbf16, #tpu.memory_space<vmem>>, vector<1x16x48xbf16>
    %167 = vector.shape_cast %166 : vector<1x16x48xbf16> to vector<16x48xbf16>
    %cst_51 = arith.constant dense<0.000000e+00> : vector<16x256xf32>
    %168 = tpu.matmul %167, %165, %cst_51 {dimension_numbers = #tpu.dot_dimension_numbers<[1], [0], [0], [1], [0, 0, 1, 1], [], []>} : vector<16x48xbf16>, vector<48x256xbf16>, vector<16x256xf32> -> vector<16x256xf32>
    %169 = arith.addf %149, %168 : vector<16x256xf32>
    %170 = vector.extract_strided_slice %121 {offsets = [0, 15], sizes = [16, 241], strides = [1, 1]} : vector<16x256xf32> to vector<16x241xf32>
    %171 = vector.extract_strided_slice %121 {offsets = [0, 0], sizes = [16, 15], strides = [1, 1]} : vector<16x256xf32> to vector<16x15xf32>
    %172 = tpu.concatenate %170, %171 in 1 : vector<16x241xf32>, vector<16x15xf32> -> vector<16x256xf32>
    %173 = arith.andi %35, %37 : vector<1x256xi1>
    %cst_52 = arith.constant 0.000000e+00 : f32
    %174 = vector.shape_cast %173 : vector<1x256xi1> to vector<1x256xi1>
    %175 = vector.broadcast %174 : vector<1x256xi1> to vector<16x256xi1>
    %176 = vector.broadcast %cst_52 : f32 to vector<16x256xf32>
    %177 = arith.select %175, %172, %176 : vector<16x256xi1>, vector<16x256xf32>
    %178 = vector.extract_strided_slice %121 {offsets = [0, 16], sizes = [16, 240], strides = [1, 1]} : vector<16x256xf32> to vector<16x240xf32>
    %179 = vector.extract_strided_slice %121 {offsets = [0, 0], sizes = [16, 16], strides = [1, 1]} : vector<16x256xf32> to vector<16x16xf32>
    %180 = tpu.concatenate %178, %179 in 1 : vector<16x240xf32>, vector<16x16xf32> -> vector<16x256xf32>
    %cst_53 = arith.constant 0.000000e+00 : f32
    %181 = vector.shape_cast %35 : vector<1x256xi1> to vector<1x256xi1>
    %182 = vector.broadcast %181 : vector<1x256xi1> to vector<16x256xi1>
    %183 = vector.broadcast %cst_53 : f32 to vector<16x256xf32>
    %184 = arith.select %182, %180, %183 : vector<16x256xi1>, vector<16x256xf32>
    %185 = vector.extract_strided_slice %121 {offsets = [0, 17], sizes = [16, 239], strides = [1, 1]} : vector<16x256xf32> to vector<16x239xf32>
    %186 = vector.extract_strided_slice %121 {offsets = [0, 0], sizes = [16, 17], strides = [1, 1]} : vector<16x256xf32> to vector<16x17xf32>
    %187 = tpu.concatenate %185, %186 in 1 : vector<16x239xf32>, vector<16x17xf32> -> vector<16x256xf32>
    %188 = arith.andi %35, %39 : vector<1x256xi1>
    %cst_54 = arith.constant 0.000000e+00 : f32
    %189 = vector.shape_cast %188 : vector<1x256xi1> to vector<1x256xi1>
    %190 = vector.broadcast %189 : vector<1x256xi1> to vector<16x256xi1>
    %191 = vector.broadcast %cst_54 : f32 to vector<16x256xf32>
    %192 = arith.select %190, %187, %191 : vector<16x256xi1>, vector<16x256xf32>
    %193 = tpu.concatenate %177, %184, %192 in 0 : vector<16x256xf32>, vector<16x256xf32>, vector<16x256xf32> -> vector<48x256xf32>
    %194 = arith.truncf %193 : vector<48x256xf32> to vector<48x256xbf16>
    %c2_55 = arith.constant 2 : index
    %c0_56 = arith.constant 0 : index
    %c0_57 = arith.constant 0 : index
    %195 = vector.load %arg4[%c2_55, %c0_56, %c0_57] : memref<3x16x48xbf16, #tpu.memory_space<vmem>>, vector<1x16x48xbf16>
    %196 = vector.shape_cast %195 : vector<1x16x48xbf16> to vector<16x48xbf16>
    %cst_58 = arith.constant dense<0.000000e+00> : vector<16x256xf32>
    %197 = tpu.matmul %196, %194, %cst_58 {dimension_numbers = #tpu.dot_dimension_numbers<[1], [0], [0], [1], [0, 0, 1, 1], [], []>} : vector<16x48xbf16>, vector<48x256xbf16>, vector<16x256xf32> -> vector<16x256xf32>
    %198 = arith.addf %169, %197 : vector<16x256xf32>
    %c0_59 = arith.constant 0 : index
    %c0_60 = arith.constant 0 : index
    %199 = vector.load %arg5[%c0_59, %c0_60] : memref<16x1xf32, #tpu.memory_space<vmem>>, vector<16x1xf32>
    %200 = vector.broadcast %199 : vector<16x1xf32> to vector<16x256xf32>
    %201 = arith.addf %198, %200 : vector<16x256xf32>
    %cst_61 = arith.constant 0.000000e+00 : f32
    %202 = vector.broadcast %cst_61 : f32 to vector<16x256xf32>
    %203 = arith.maximumf %201, %202 : vector<16x256xf32>
    %204 = vector.shape_cast %203 : vector<16x256xf32> to vector<1x16x256xf32>
    %c0_62 = arith.constant 0 : index
    %c0_63 = arith.constant 0 : index
    %c0_64 = arith.constant 0 : index
    %205 = vector.load %arg6[%c0_62, %c0_63, %c0_64] : memref<1x16x256xf32, #tpu.memory_space<vmem>>, vector<1x16x256xf32>
    tpu.vector_store %arg6[%c0_62, %c0_63, %c0_64], %204 {strides = array<i32>} : memref<1x16x256xf32, #tpu.memory_space<vmem>>, vector<1x16x256xf32>,
    return
  }
  func.func @transform_0(%arg0: i32) -> (i32, i32, i32, i32) {
    %c0_i32 = arith.constant 0 : i32
    %c0_i32_0 = arith.constant 0 : i32
    %c0_i32_1 = arith.constant 0 : i32
    %c0_i32_2 = arith.constant 0 : i32
    return %arg0, %c0_i32, %c0_i32_0, %c0_i32_1 : i32, i32, i32, i32
  }
  func.func @transform_1(%arg0: i32) -> (i32, i32, i32) {
    %c0_i32 = arith.constant 0 : i32
    %c0_i32_0 = arith.constant 0 : i32
    %c0_i32_1 = arith.constant 0 : i32
    %c0_i32_2 = arith.constant 0 : i32
    return %c0_i32, %c0_i32_0, %c0_i32_1 : i32, i32, i32
  }
  func.func @transform_2(%arg0: i32) -> (i32, i32) {
    %c0_i32 = arith.constant 0 : i32
    %c0_i32_0 = arith.constant 0 : i32
    %c0_i32_1 = arith.constant 0 : i32
    return %c0_i32, %c0_i32_0 : i32, i32
  }
  func.func @transform_3(%arg0: i32) -> (i32, i32, i32) {
    %c0_i32 = arith.constant 0 : i32
    %c0_i32_0 = arith.constant 0 : i32
    %c0_i32_1 = arith.constant 0 : i32
    %c0_i32_2 = arith.constant 0 : i32
    return %c0_i32, %c0_i32_0, %c0_i32_1 : i32, i32, i32
  }
  func.func @transform_4(%arg0: i32) -> (i32, i32) {
    %c0_i32 = arith.constant 0 : i32
    %c0_i32_0 = arith.constant 0 : i32
    %c0_i32_1 = arith.constant 0 : i32
    return %c0_i32, %c0_i32_0 : i32, i32
  }
  func.func @transform_5(%arg0: i32) -> (i32, i32, i32) {
    %c0_i32 = arith.constant 0 : i32
    %c0_i32_0 = arith.constant 0 : i32
    %c0_i32_1 = arith.constant 0 : i32
    return %arg0, %c0_i32, %c0_i32_0 : i32, i32, i32
  }
}

</mosaic_0001>

<llo_original>
// kernel: tpu_custom_call.1
$region0: #{tpu_custom_call.1}
  #allocation0 [shape = 'u32[]', space=smem, size = 0x4, offset = 0x4, fixed_abs, tag = 'smem constant byte address 0x4 - core index']
  #allocation1 [shape = 'u32[144,128]{1,0:T(1,128)}', space=vmem, size = 0x12000, scoped, tag = 'internal scratch']
  %s0 = inlined_call_operand.hbm [shape: f32[8,256], index: 0, kind: input, shape index: {}]
  %s1 = inlined_call_operand.hbm [shape: f32[8,256], index: 1, kind: output, shape index: {}]
  %s2 = sld [smem:[#allocation0]]
  $region18: #{tpu_custom_call.1} parent=0
    _
  %s4 = ssub.s32 1, %s2
  %s5 = scalar_select 0, %s4, %s2
  $region1: #{tpu_custom_call.1} parent=0
    #allocation2 [shape = 'u8[8192]{0}', space=vmem, size = 0x2000, scoped, tag = 'input window, operand 0, single buffered']
    #allocation3 [shape = 's32[1]{0}', space=sflag, size = 0x4, scoped, tag = 'scoped memory for tpu_custom_call.1']
    #allocation4 [shape = 's32[1]{0}', space=sflag, size = 0x4, scoped, tag = 'scoped memory for tpu_custom_call.1']
    #allocation5 [shape = 'u8[8192]{0}', space=vmem, size = 0x2000, scoped, tag = 'output window, operand 0, single buffered']
    %6 = vsyncpa [#allocation3], 0
    %7 = vsyncpa [#allocation4], 0
    // Predicated region
    $region2: #{tpu_custom_call.1} parent=1 // pred_check
      _
    $region3: #{tpu_custom_call.1} parent=1 // pred_check_branch
      %9 = sbr.rel (0) target = $region5
    $region4: #{tpu_custom_call.1} parent=1 // pred_region
      %s11 = ssub.s32 256, 256
      %12 = vsyncadd [#allocation3], %s11
      %s14 = sshll.u32 [#allocation2], 4
      %s15 = int_to_ptr.vmem [resolvable:$true] %s14
      %17 = dma.hbm_to_vmem [thread:$0]  %s0, 256, %s15, [#allocation3]
    $region5: #{tpu_custom_call.1} parent=1 // pred_fallthru
      _
    // Predicated region
    $region6: #{tpu_custom_call.1} parent=1 // pred_check
      _
    $region7: #{tpu_custom_call.1} parent=1 // pred_check_branch
      %19 = sbr.rel (0) target = $region9
    $region8: #{tpu_custom_call.1} parent=1 // pred_region
      %20 = dma.done [#allocation3], 256
    $region9: #{tpu_custom_call.1} parent=1 // pred_fallthru
      _
    %v21 = vld [vmem:[#allocation2] sm:$0xff]
    %v22 = vld [vmem:[#allocation2 + $0x8] sm:$0xff]
    %23 = vrot.lane.b32.xlu0 %v21, 3
    %v24 = vpop.permute.xlu0 %23
    %25 = vrot.lane.b32.xlu0 %v22, 3
    %v26 = vpop.permute.xlu0 %25
    %v27 = vlaneseq
    %v28 = vand.u32 %v27, 127
    %vm29 = vcmp.lt.s32.totalorder %v28, 3
    %v30 = vsel %vm29, %v24, %v26
    %v31 = vsel %vm29, %v26, %v24
    %32 = vst [vmem:[#allocation5] sm:$0xff] %v31
    %33 = vst [vmem:[#allocation5 + $0x8] sm:$0xff] %v30
    // Predicated region
    $region10: #{tpu_custom_call.1} parent=1 // pred_check
      _
    $region11: #{tpu_custom_call.1} parent=1 // pred_check_branch
      %35 = sbr.rel (0) target = $region13
    $region12: #{tpu_custom_call.1} parent=1 // pred_region
      %s37 = ssub.s32 256, 256
      %38 = vsyncadd [#allocation4], %s37
      %s40 = sshll.u32 [#allocation5], 4
      %s41 = int_to_ptr.vmem [resolvable:$true] %s40
      %43 = dma.vmem_to_hbm [thread:$0]  %s41, 256, %s1, [#allocation4]
    $region13: #{tpu_custom_call.1} parent=1 // pred_fallthru
      _
    // Predicated region
    $region14: #{tpu_custom_call.1} parent=1 // pred_check
      _
    $region15: #{tpu_custom_call.1} parent=1 // pred_check_branch
      %45 = sbr.rel (0) target = $region17
    $region16: #{tpu_custom_call.1} parent=1 // pred_region
      %46 = dma.done [#allocation4], 256
    $region17: #{tpu_custom_call.1} parent=1 // pred_fallthru
      _
    %47 = vsyncpa [#allocation3], 1
    %48 = vsyncpa [#allocation4], 1

// kernel: tpu_custom_call.1
$region0: #{tpu_custom_call.1}
  #allocation0 [shape = 'u32[]', space=smem, size = 0x4, offset = 0x4, fixed_abs, tag = 'smem constant byte address 0x4 - core index']
  #allocation1 [shape = 'u32[144,128]{1,0:T(1,128)}', space=vmem, size = 0x12000, scoped, tag = 'internal scratch']
  %s0 = inlined_call_operand.hbm [shape: bf16[2,4,8,256], index: 0, kind: input, shape index: {}]
  %s1 = inlined_call_operand.vmem [shape: bf16[3,16,24], index: 1, kind: input, shape index: {}]
  %s2 = inlined_call_operand.vmem [shape: f32[16,1], index: 2, kind: input, shape index: {}]
  %s3 = inlined_call_operand.hbm [shape: bf16[3,16,48], index: 3, kind: input, shape index: {}]
  %s4 = inlined_call_operand.vmem [shape: f32[16,1], index: 4, kind: input, shape index: {}]
  %s5 = inlined_call_operand.hbm [shape: f32[2,16,256], index: 5, kind: output, shape index: {}]
  %s6 = sld [smem:[#allocation0]]
  $region61: #{tpu_custom_call.1} parent=0
    _
  %s8 = ssub.s32 1, %s6
  %s9 = scalar_select 0, %s8, %s6
  $region1: #{tpu_custom_call.1} parent=0
    #allocation2 [shape = 'u8[32768]{0}', space=vmem, size = 0x8000, scoped, tag = 'input window, operand 0']
    #allocation3 [shape = 's32[2]{0}', space=sflag, size = 0x8, scoped, tag = 'scoped memory for tpu_custom_call.1']
    #allocation4 [shape = 's32[2]{0}', space=sflag, size = 0x8, scoped, tag = 'scoped memory for tpu_custom_call.1']
    #allocation5 [shape = 'u8[12288]{0}', space=vmem, size = 0x3000, scoped, tag = 'input window, operand 3, single buffered']
    #allocation6 [shape = 's32[1]{0}', space=sflag, size = 0x4, scoped, tag = 'scoped memory for tpu_custom_call.1']
    #allocation7 [shape = 'u8[32768]{0}', space=vmem, size = 0x8000, scoped, tag = 'output window, operand 0']
    %10 = vsyncpa [#allocation3], 0
    %s11 = scalar_lea.sflag [#allocation3], 1
    %12 = vsyncpa %s11, 0
    %13 = vsyncpa [#allocation6], 0
    %14 = vsyncpa [#allocation4], 0
    %s15 = scalar_lea.sflag [#allocation4], 1
    %16 = vsyncpa %s15, 0
    loop: start=0, step=1, limit=4
    $region2: #{tpu_custom_call.1} parent=1 // loop_pre_header
      _
    $region3: #{tpu_custom_call.1} parent=1 // loop_header
      %s18 = sphi 0, %s22
      %p19 = scmp.ge.s32.totalorder %s18, 4
      %s28 = sphi 0, %s30
      %s31 = sphi 0, %s28
      %s32 = sphi 0, %s31
      %s48 = sphi 0, %s32
      %s52 = sphi 0, %s52
      %s54 = sphi 0, %s52
      %s55 = sphi 0, %s54
      %s69 = sphi 0, %s55
      %s73 = sphi 0, %s73
      %s75 = sphi 0, %s73
      %s76 = sphi 0, %s75
      %s90 = sphi 0, %s76
      %s94 = sphi 0, %s94
      %s96 = sphi 0, %s94
      %s97 = sphi 0, %s96
      %s111 = sphi 0, %s97
      %s115 = sphi 0, %s115
      %s117 = sphi 0, %s115
      %s118 = sphi 0, %s117
      %s132 = sphi 0, %s118
      %s138 = sphi 0, %s140
      %s141 = sphi 0, %s138
      %s142 = sphi 0, %s141
      %s158 = sphi 0, %s142
    $region4: #{tpu_custom_call.1} parent=1 // loop_header_branch
      %21 = sbr.rel (%p19) target = $region8
    $region5: #{tpu_custom_call.1} parent=1 // loop_body
      %s23 = ssub.s32 %s18, 1
      %s24 = ssub.s32 %s18, 2
      %s25 = sadd.s32 %s18, 1
      %s26 = ssub.s32 %s18, %s25
      %p27 = scmp.eq.s32.totalorder %s26, 0
      %s29 = sadd.s32 %s28, 1
      %s30 = scalar_select %p27, %s28, %s29
      %p33 = pneg %p27
      %p34 = scmp.eq.s32.totalorder %s18, 1
      %p35 = por %p33, %p34
      %p36 = scmp.ne.s32.totalorder %s28, %s31
      %p37 = scmp.eq.s32.totalorder %s18, 0
      %p38 = por %p36, %p37
      %p39 = scmp.ne.s32.totalorder %s28, %s31
      %p40 = scmp.eq.s32.totalorder %s23, 1
      %p41 = por %p39, %p40
      %p42 = scmp.ne.s32.totalorder %s31, %s32
      %p43 = scmp.eq.s32.totalorder %s23, 0
      %p44 = por %p42, %p43
      %p45 = scmp.ne.s32.totalorder %s31, %s32
      %p46 = scmp.eq.s32.totalorder %s24, 1
      %p47 = por %p45, %p46
      %p49 = scmp.ne.s32.totalorder %s32, %s48
      %p50 = scmp.eq.s32.totalorder %s24, 0
      %p51 = por %p49, %p50
      %s53 = sadd.s32 %s52, 1
      %p56 = scmp.eq.s32.totalorder %s18, 1
      %p57 = scmp.ne.s32.totalorder %s52, %s54
      %p58 = scmp.eq.s32.totalorder %s18, 0
      %p59 = por %p57, %p58
      %p60 = scmp.ne.s32.totalorder %s52, %s54
      %p61 = scmp.eq.s32.totalorder %s23, 1
      %p62 = por %p60, %p61
      %p63 = scmp.ne.s32.totalorder %s54, %s55
      %p64 = scmp.eq.s32.totalorder %s23, 0
      %p65 = por %p63, %p64
      %p66 = scmp.ne.s32.totalorder %s54, %s55
      %p67 = scmp.eq.s32.totalorder %s24, 1
      %p68 = por %p66, %p67
      %p70 = scmp.ne.s32.totalorder %s55, %s69
      %p71 = scmp.eq.s32.totalorder %s24, 0
      %p72 = por %p70, %p71
      %s74 = sadd.s32 %s73, 1
      %p77 = scmp.eq.s32.totalorder %s18, 1
      %p78 = scmp.ne.s32.totalorder %s73, %s75
      %p79 = scmp.eq.s32.totalorder %s18, 0
      %p80 = por %p78, %p79
      %p81 = scmp.ne.s32.totalorder %s73, %s75
      %p82 = scmp.eq.s32.totalorder %s23, 1
      %p83 = por %p81, %p82
      %p84 = scmp.ne.s32.totalorder %s75, %s76
      %p85 = scmp.eq.s32.totalorder %s23, 0
      %p86 = por %p84, %p85
      %p87 = scmp.ne.s32.totalorder %s75, %s76
      %p88 = scmp.eq.s32.totalorder %s24, 1
      %p89 = por %p87, %p88
      %p91 = scmp.ne.s32.totalorder %s76, %s90
      %p92 = scmp.eq.s32.totalorder %s24, 0
      %p93 = por %p91, %p92
      %s95 = sadd.s32 %s94, 1
      %p98 = scmp.eq.s32.totalorder %s18, 1
      %p99 = scmp.ne.s32.totalorder %s94, %s96
      %p100 = scmp.eq.s32.totalorder %s18, 0
      %p101 = por %p99, %p100
      %p102 = scmp.ne.s32.totalorder %s94, %s96
      %p103 = scmp.eq.s32.totalorder %s23, 1
      %p104 = por %p102, %p103
      %p105 = scmp.ne.s32.totalorder %s96, %s97
      %p106 = scmp.eq.s32.totalorder %s23, 0
      %p107 = por %p105, %p106
      %p108 = scmp.ne.s32.totalorder %s96, %s97
      %p109 = scmp.eq.s32.totalorder %s24, 1
      %p110 = por %p108, %p109
      %p112 = scmp.ne.s32.totalorder %s97, %s111
      %p113 = scmp.eq.s32.totalorder %s24, 0
      %p114 = por %p112, %p113
      %s116 = sadd.s32 %s115, 1
      %p119 = scmp.eq.s32.totalorder %s18, 1
      %p120 = scmp.ne.s32.totalorder %s115, %s117
      %p121 = scmp.eq.s32.totalorder %s18, 0
      %p122 = por %p120, %p121
      %p123 = scmp.ne.s32.totalorder %s115, %s117
      %p124 = scmp.eq.s32.totalorder %s23, 1
      %p125 = por %p123, %p124
      %p126 = scmp.ne.s32.totalorder %s117, %s118
      %p127 = scmp.eq.s32.totalorder %s23, 0
      %p128 = por %p126, %p127
      %p129 = scmp.ne.s32.totalorder %s117, %s118
      %p130 = scmp.eq.s32.totalorder %s24, 1
      %p131 = por %p129, %p130
      %p133 = scmp.ne.s32.totalorder %s118, %s132
      %p134 = scmp.eq.s32.totalorder %s24, 0
      %p135 = por %p133, %p134
      %s136 = ssub.s32 %s18, %s25
      %p137 = scmp.eq.s32.totalorder %s136, 0
      %s139 = sadd.s32 %s138, 1
      %s140 = scalar_select %p137, %s138, %s139
      %p143 = pneg %p137
      %p144 = scmp.eq.s32.totalorder %s18, 1
      %p145 = por %p143, %p144
      %p146 = scmp.ne.s32.totalorder %s138, %s141
      %p147 = scmp.eq.s32.totalorder %s18, 0
      %p148 = por %p146, %p147
      %p149 = scmp.ne.s32.totalorder %s138, %s141
      %p150 = scmp.eq.s32.totalorder %s23, 1
      %p151 = por %p149, %p150
      %p152 = scmp.ne.s32.totalorder %s141, %s142
      %p153 = scmp.eq.s32.totalorder %s23, 0
      %p154 = por %p152, %p153
      %p155 = scmp.ne.s32.totalorder %s141, %s142
      %p156 = scmp.eq.s32.totalorder %s24, 1
      %p157 = por %p155, %p156
      %p159 = scmp.ne.s32.totalorder %s142, %s158
      %p160 = scmp.eq.s32.totalorder %s24, 0
      %p161 = por %p159, %p160
      %p162 = scmp.le.s32.totalorder 1, %s18
      %p163 = scmp.lt.s32.totalorder %s18, 3
      %p164 = pnand %p162, %p163
      %p165 = pneg %p164
      // Predicated region
      $region9: #{tpu_custom_call.1} parent=5 // pred_check
        _
      $region10: #{tpu_custom_call.1} parent=5 // pred_check_branch
        %167 = sbr.rel (%p164) target = $region12
      $region11: #{tpu_custom_call.1} parent=5 // pred_region
        %s168 = ssub.s32 %s18, 1
        // Predicated region
        $region13: #{tpu_custom_call.1} parent=11 // pred_check
          %p169 = pneg %p65
        $region14: #{tpu_custom_call.1} parent=11 // pred_check_branch
          %171 = sbr.rel (%p169) target = $region16
        $region15: #{tpu_custom_call.1} parent=11 // pred_region
          _
        $region16: #{tpu_custom_call.1} parent=11 // pred_fallthru
          _
        // Predicated region
        $region17: #{tpu_custom_call.1} parent=11 // pred_check
          %p172 = pneg %p86
        $region18: #{tpu_custom_call.1} parent=11 // pred_check_branch
          %174 = sbr.rel (%p172) target = $region20
        $region19: #{tpu_custom_call.1} parent=11 // pred_region
          _
        $region20: #{tpu_custom_call.1} parent=11 // pred_fallthru
          _
        // Predicated region
        $region21: #{tpu_custom_call.1} parent=11 // pred_check
          %p175 = pneg %p107
        $region22: #{tpu_custom_call.1} parent=11 // pred_check_branch
          %177 = sbr.rel (%p175) target = $region24
        $region23: #{tpu_custom_call.1} parent=11 // pred_region
          %s179 = ssub.s32 384, 384
          %180 = vsyncadd [#allocation6], %s179
          %s181 = sshll.u32 [#allocation5], 4
          %s182 = int_to_ptr.vmem [resolvable:$true] %s181
          %187 = dma.hbm_to_vmem [thread:$0]  %s3, 384, %s182, [#allocation6], 64, 64, 4
        $region24: #{tpu_custom_call.1} parent=11 // pred_fallthru
          _
        // Predicated region
        $region25: #{tpu_custom_call.1} parent=11 // pred_check
          %p188 = pneg %p128
        $region26: #{tpu_custom_call.1} parent=11 // pred_check_branch
          %190 = sbr.rel (%p188) target = $region28
        $region27: #{tpu_custom_call.1} parent=11 // pred_region
          _
        $region28: #{tpu_custom_call.1} parent=11 // pred_fallthru
          _
      $region12: #{tpu_custom_call.1} parent=5 // pred_fallthru
        _
      %p191 = scmp.lt.s32.totalorder %s18, 2
      // Predicated region
      $region29: #{tpu_custom_call.1} parent=5 // pred_check
        %p192 = pneg %p191
      $region30: #{tpu_custom_call.1} parent=5 // pred_check_branch
        %194 = sbr.rel (%p192) target = $region32
      $region31: #{tpu_custom_call.1} parent=5 // pred_region
        // Predicated region
        $region33: #{tpu_custom_call.1} parent=31 // pred_check
          %p195 = pneg %p38
        $region34: #{tpu_custom_call.1} parent=31 // pred_check_branch
          %197 = sbr.rel (%p195) target = $region36
        $region35: #{tpu_custom_call.1} parent=31 // pred_region
          %s198 = sand.u32 %s28, 1
          %s199 = scalar_lea.sflag [#allocation3], %s198
          %s200 = sand.u32 %s28, 1
          %s201 = smul.addr %s200, 32
          %s202 = scalar_lea.vmem [#allocation2], %s201
          %s204 = ssub.s32 512, 512
          %205 = vsyncadd %s199, %s204
          %s206 = smul.addr %s18, 8
          %s207 = smul.addr %s206, 64
          %s208 = scalar_lea.hbm %s0, %s207
          %s209 = sshll.u32 %s202, 4
          %s210 = int_to_ptr.vmem [resolvable:$true] %s209
          %215 = dma.hbm_to_vmem [thread:$0]  %s208, 512, %s210, %s199, 128, 128, 8
        $region36: #{tpu_custom_call.1} parent=31 // pred_fallthru
          _
      $region32: #{tpu_custom_call.1} parent=5 // pred_fallthru
        _
      %p216 = scmp.le.s32.totalorder 1, %s18
      %p217 = scmp.lt.s32.totalorder %s18, 3
      %p218 = pnand %p216, %p217
      %p219 = pneg %p218
      // Predicated region
      $region37: #{tpu_custom_call.1} parent=5 // pred_check
        _
      $region38: #{tpu_custom_call.1} parent=5 // pred_check_branch
        %221 = sbr.rel (%p218) target = $region40
      $region39: #{tpu_custom_call.1} parent=5 // pred_region
        %s222 = ssub.s32 %s18, 1
        %s223 = sand.u32 %s31, 1
        %s224 = scalar_lea.sflag [#allocation3], %s223
        %s225 = sand.u32 %s31, 1
        %s226 = smul.addr %s225, 32
        %s227 = scalar_lea.vmem [#allocation2], %s226
        // Predicated region
        $region41: #{tpu_custom_call.1} parent=39 // pred_check
          %p228 = pneg %p44
        $region42: #{tpu_custom_call.1} parent=39 // pred_check_branch
          %230 = sbr.rel (%p228) target = $region44
        $region43: #{tpu_custom_call.1} parent=39 // pred_region
          %231 = dma.done %s224, 512
        $region44: #{tpu_custom_call.1} parent=39 // pred_fallthru
          _
        // Predicated region
        $region45: #{tpu_custom_call.1} parent=39 // pred_check
          %p232 = pneg %p107
        $region46: #{tpu_custom_call.1} parent=39 // pred_check_branch
          %234 = sbr.rel (%p232) target = $region48
        $region47: #{tpu_custom_call.1} parent=39 // pred_region
          %235 = dma.done [#allocation6], 384
        $region48: #{tpu_custom_call.1} parent=39 // pred_fallthru
          _
        %s236 = sand.u32 %s31, 1
        %s237 = scalar_lea.sflag [#allocation3], %s236
        %s238 = sand.u32 %s31, 1
        %s239 = smul.addr %s238, 32
        %s240 = scalar_lea.vmem [#allocation2], %s239
        %p241 = pneg %p44
        %p242 = pneg %p41
        %p243 = pneg %p65
        %p244 = pneg %p62
        %p245 = pneg %p86
        %p246 = pneg %p83
        %p247 = pneg %p107
        %p248 = pneg %p104
        %p249 = pneg %p128
        %p250 = pneg %p125
        %p251 = pneg %p154
        %p252 = pneg %p151
        %s253 = sand.u32 %s141, 1
        %s254 = scalar_lea.sflag [#allocation4], %s253
        %s255 = sand.u32 %s141, 1
        %s256 = smul.addr %s255, 32
        %s257 = scalar_lea.vmem [#allocation7], %s256
        %v259 = vld [vmem:[%s227] sm:$0xff]
        %v260 = vunpack.c.l.bf16 %v259
        %v261 = vunpack.c.h.bf16 %v259
        %s262 = scalar_lea.vmem %s227, 8 [#allocation2]
        %v263 = vld [vmem:[%s262] sm:$0xff]
        %v264 = vunpack.c.l.bf16 %v263
        %v265 = vunpack.c.h.bf16 %v263
        %v266 = vmax.f32 %v260, %v264
        %v267 = vmax.f32 %v261, %v265
        %s268 = scalar_lea.vmem %s227, 16 [#allocation2]
        %v269 = vld [vmem:[%s268] sm:$0xff]
        %v270 = vunpack.c.l.bf16 %v269
        %v271 = vunpack.c.h.bf16 %v269
        %s272 = scalar_lea.vmem %s227, 24 [#allocation2]
        %v273 = vld [vmem:[%s272] sm:$0xff]
        %v274 = vunpack.c.l.bf16 %v273
        %v275 = vunpack.c.h.bf16 %v273
        %v276 = vmax.f32 %v270, %v274
        %v277 = vmax.f32 %v271, %v275
        %v278 = vmax.f32 %v266, %v276
        %v279 = vmax.f32 %v267, %v277
        %v280 = vlaneseq
        %v281 = vand.u32 %v280, 127
        %v282 = vadd.s32 %v281, 128
        %vm283 = vcmp.lt.s32.totalorder %v281, 0
        %v284 = vsub.s32 0, %v281
        %v285 = vsel %vm283, %v284, %v281
        %v286 = vshrl.u32 %v285, 4
        %v287 = vand.u32 %v285, 15
        %v288 = vsub.s32 0, %v287
        %v289 = vsel %vm283, %v288, %v287
        %vm290 = vcmp.lt.s32.totalorder %v282, 0
        %v291 = vsub.s32 0, %v282
        %v292 = vsel %vm290, %v291, %v282
        %v293 = vshrl.u32 %v292, 4
        %v294 = vand.u32 %v292, 15
        %v295 = vsub.s32 0, %v294
        %v296 = vsel %vm290, %v295, %v294
        %vm297 = vcmp.ne.s32.totalorder %v289, 0
        %vm298 = vcmp.ne.s32.totalorder %v296, 0
        %vm299 = vcmp.lt.s32.totalorder %v289, 0
        %vm300 = vcmp.lt.s32.totalorder %v296, 0
        %vm301 = vmand %vm299, %vm297
        %vm302 = vmand %vm300, %vm298
        %v303 = vadd.s32 %v289, 16
        %v304 = vadd.s32 %v296, 16
        %v305 = vsel %vm301, %v303, %v289
        %v306 = vsel %vm302, %v304, %v296
        %vm307 = vcmp.ge.s32.totalorder %v281, 16
        %vm308 = vcmp.ge.s32.totalorder %v282, 16
        %vm309 = vcmp.lt.s32.totalorder %v281, 240
        %vm310 = vcmp.lt.s32.totalorder %v282, 240
        %vm311 = vcmp.ge.s32.totalorder %v305, 1
        %vm312 = vcmp.ge.s32.totalorder %v306, 1
        %vm313 = vcmp.lt.s32.totalorder %v305, 15
        %vm314 = vcmp.lt.s32.totalorder %v306, 15
        %316 = vrot.lane.b32.xlu0 %v279, 17
        %v317 = vpop.permute.xlu0 %316
        %320 = vrot.lane.b32.xlu0 %v278, 17
        %v321 = vpop.permute.xlu0 %320
        %vm322 = vcmask 138240
        %v323 = vsel %vm322, %v321, %v317
        %v326 = vsel %vm322, %v317, %v321
        %vm327 = vmand %vm307, %vm311
        %vm328 = vmand %vm308, %vm312
        %v329 = vsel %vm327, 1, 0
        %v330 = vsel %vm328, 1, 0
        %vm331 = vcmp.eq.s32.totalorder %v329, 1
        %vm332 = vcmp.eq.s32.totalorder %v330, 1
        %v333 = vsel %vm331, %v326, 0.0
        %v334 = vsel %vm332, %v323, 0.0
        %335 = vrot.lane.b32.xlu0 %v279, 16
        %v336 = vpop.permute.xlu0 %335
        %338 = vrot.lane.b32.xlu0 %v278, 16
        %v339 = vpop.permute.xlu0 %338
        %vm340 = vcmask 130048
        %v341 = vsel %vm340, %v339, %v336
        %v344 = vsel %vm340, %v336, %v339
        %v345 = vsel %vm307, 1, 0
        %v346 = vsel %vm308, 1, 0
        %vm347 = vcmp.eq.s32.totalorder %v345, 1
        %vm348 = vcmp.eq.s32.totalorder %v346, 1
        %v349 = vsel %vm347, %v344, 0.0
        %v350 = vsel %vm348, %v341, 0.0
        %351 = vrot.lane.b32.xlu0 %v279, 15
        %v352 = vpop.permute.xlu0 %351
        %354 = vrot.lane.b32.xlu0 %v278, 15
        %v355 = vpop.permute.xlu0 %354
        %vm356 = vcmask 121856
        %v357 = vsel %vm356, %v355, %v352
        %v360 = vsel %vm356, %v352, %v355
        %vm361 = vmand %vm307, %vm313
        %vm362 = vmand %vm308, %vm314
        %v363 = vsel %vm361, 1, 0
        %v364 = vsel %vm362, 1, 0
        %vm365 = vcmp.eq.s32.totalorder %v363, 1
        %vm366 = vcmp.eq.s32.totalorder %v364, 1
        %v367 = vsel %vm365, %v360, 0.0
        %v368 = vsel %vm366, %v357, 0.0
        %v369 = vpack.c.bf16 %v349, %v333
        %v370 = vpack.c.bf16 %v350, %v334
        %v371 = vpack.c.bf16 %v367, %v367
        %v372 = vpack.c.bf16 %v368, %v368
        %v373 = vld [vmem:[%s1] sm:$0xf]
        %v374 = vld [vmem:[%s1 + $0x4] sm:$0xf]
        %375 = vrot.lane.b32.xlu0 %v279, 1
        %v376 = vpop.permute.xlu0 %375
        %378 = vrot.lane.b32.xlu0 %v278, 1
        %v379 = vpop.permute.xlu0 %378
        %vm380 = vcmask 7168
        %v381 = vsel %vm380, %v379, %v376
        %v384 = vsel %vm380, %v376, %v379
        %v385 = vsel %vm311, 1, 0
        %v386 = vsel %vm312, 1, 0
        %vm387 = vcmp.eq.s32.totalorder %v385, 1
        %vm388 = vcmp.eq.s32.totalorder %v386, 1
        %v389 = vsel %vm387, %v384, 0.0
        %v390 = vsel %vm388, %v381, 0.0
        %391 = vrot.lane.b32.xlu0 %v278, 127
        %v392 = vpop.permute.xlu0 %391
        %393 = vrot.lane.b32.xlu0 %v279, 127
        %v394 = vpop.permute.xlu0 %393
        %vm395 = vcmask 1039360
        %v396 = vsel %vm395, %v392, %v394
        %v400 = vsel %vm395, %v394, %v392
        %v401 = vsel %vm313, 1, 0
        %v402 = vsel %vm314, 1, 0
        %vm403 = vcmp.eq.s32.totalorder %v401, 1
        %vm404 = vcmp.eq.s32.totalorder %v402, 1
        %v405 = vsel %vm403, %v396, 0.0
        %v406 = vsel %vm404, %v400, 0.0
        %v407 = vpack.c.bf16 %v278, %v389
        %v408 = vpack.c.bf16 %v279, %v390
        %v409 = vpack.c.bf16 %v405, %v405
        %v410 = vpack.c.bf16 %v406, %v406
        %s411 = scalar_lea.vmem %s1, 8
        %v412 = vld [vmem:[%s411] sm:$0xf]
        %v413 = vld [vmem:[%s411 + $0x4] sm:$0xf]
        %v416 = vunpack.c.l.b16 %v412
        %v417 = vunpack.c.l.b16 %v413
        %v418 = vpack.c.b16 %v417, %v416
        %vm419 = vcmask 195584
        %v421 = vsel %vm419, %v418, 0
        %vm423 = vcmask 1043456
        %v425 = vsel %vm423, %v409, 0
        %v428 = vsel %vm423, %v410, 0
        %430 = vmatprep.subr.bf16.mxu0 0
        %431 = vmatpush1.bf16.msra.mxu0 0
        %432 = vmatprep.subr.bf16.mxu0 0
        %433 = vmatpush1.bf16.msra.mxu0 0
        %434 = vmatprep.subr.bf16.mxu0 0
        %435 = vmatpush1.bf16.msra.mxu0 0
        %436 = vmatprep.subr.bf16.mxu0 0
        %437 = vmatpush1.bf16.msra.mxu0 0
        %438 = vmatprep.subr.bf16.mxu0 0
        %439 = vmatpush1.bf16.msra.mxu0 0
        %440 = vmatprep.subr.bf16.mxu0 0
        %441 = vmatpush1.bf16.msra.mxu0 0
        %442 = vmatprep.subr.bf16.mxu0 %v428
        %443 = vmatpush1.bf16.msra.mxu0 %v425
        %444 = vmatprep.subr.bf16.mxu0 %v408
        %445 = vmatpush1.bf16.msra.mxu0 %v407
        %446 = vmatprep.subr.bf16.mxu0 0
        %447 = vmatpush2.bf16.msra.mxu0 0
        %448 = vmatprep.subr.bf16.mxu0 0
        %449 = vmatpush2.bf16.msra.mxu0 0
        %450 = vmatprep.subr.bf16.mxu0 0
        %451 = vmatpush2.bf16.msra.mxu0 0
        %452 = vmatprep.subr.bf16.mxu0 0
        %453 = vmatpush2.bf16.msra.mxu0 0
        %454 = vmatprep.subr.bf16.mxu0 0
        %455 = vmatpush2.bf16.msra.mxu0 0
        %456 = vmatprep.subr.bf16.mxu0 0
        %457 = vmatpush2.bf16.msra.mxu0 0
        %458 = vmatprep.subr.bf16.mxu0 0
        %459 = vmatpush2.bf16.msra.mxu0 0
        %460 = vmatprep.subr.bf16.mxu0 0
        %461 = vmatpush2.bf16.msra.mxu0 0
        %462 = vmatprep.mubr.bf16.mxu0 0
        %463 = vmatmul.mubr.bf16.gmra.mxu0 %v421
        %v464 = vpop.f32.mrf.mxu0
        %v465 = vadd.f32 0.0, %v464
        %v466 = vpop.f32.mrf.mxu0
        %v467 = vadd.f32 0.0, %v466
        %v468 = vpop.f32.mrf.mxu0
        %v469 = vadd.f32 0.0, %v468
        %v470 = vpop.f32.mrf.mxu0
        %v471 = vadd.f32 0.0, %v470
        %472 = vdwg.mxu0
        %v475 = vunpack.c.l.b16 %v373
        %v476 = vunpack.c.l.b16 %v374
        %v477 = vpack.c.b16 %v476, %v475
        %v479 = vsel %vm419, %v477, 0
        %v482 = vsel %vm423, %v371, 0
        %v485 = vsel %vm423, %v372, 0
        %487 = vmatprep.subr.bf16.mxu0 0
        %488 = vmatpush1.bf16.msra.mxu0 0
        %489 = vmatprep.subr.bf16.mxu0 0
        %490 = vmatpush1.bf16.msra.mxu0 0
        %491 = vmatprep.subr.bf16.mxu0 0
        %492 = vmatpush1.bf16.msra.mxu0 0
        %493 = vmatprep.subr.bf16.mxu0 0
        %494 = vmatpush1.bf16.msra.mxu0 0
        %495 = vmatprep.subr.bf16.mxu0 0
        %496 = vmatpush1.bf16.msra.mxu0 0
        %497 = vmatprep.subr.bf16.mxu0 0
        %498 = vmatpush1.bf16.msra.mxu0 0
        %499 = vmatprep.subr.bf16.mxu0 %v485
        %500 = vmatpush1.bf16.msra.mxu0 %v482
        %501 = vmatprep.subr.bf16.mxu0 %v370
        %502 = vmatpush1.bf16.msra.mxu0 %v369
        %503 = vmatprep.subr.bf16.mxu0 0
        %504 = vmatpush2.bf16.msra.mxu0 0
        %505 = vmatprep.subr.bf16.mxu0 0
        %506 = vmatpush2.bf16.msra.mxu0 0
        %507 = vmatprep.subr.bf16.mxu0 0
        %508 = vmatpush2.bf16.msra.mxu0 0
        %509 = vmatprep.subr.bf16.mxu0 0
        %510 = vmatpush2.bf16.msra.mxu0 0
        %511 = vmatprep.subr.bf16.mxu0 0
        %512 = vmatpush2.bf16.msra.mxu0 0
        %513 = vmatprep.subr.bf16.mxu0 0
        %514 = vmatpush2.bf16.msra.mxu0 0
        %515 = vmatprep.subr.bf16.mxu0 0
        %516 = vmatpush2.bf16.msra.mxu0 0
        %517 = vmatprep.subr.bf16.mxu0 0
        %518 = vmatpush2.bf16.msra.mxu0 0
        %519 = vmatprep.mubr.bf16.mxu0 0
        %520 = vmatmul.mubr.bf16.gmra.mxu0 %v479
        %v521 = vpop.f32.mrf.mxu0
        %v522 = vadd.f32 %v465, %v521
        %v523 = vpop.f32.mrf.mxu0
        %v524 = vadd.f32 %v467, %v523
        %v525 = vpop.f32.mrf.mxu0
        %v526 = vadd.f32 %v469, %v525
        %v527 = vpop.f32.mrf.mxu0
        %v528 = vadd.f32 %v471, %v527
        %529 = vdwg.mxu0
        %530 = vrot.lane.b32.xlu0 %v278, 113
        %v531 = vpop.permute.xlu0 %530
        %532 = vrot.lane.b32.xlu0 %v279, 113
        %v533 = vpop.permute.xlu0 %532
        %vm534 = vcmask 924672
        %v535 = vsel %vm534, %v531, %v533
        %v539 = vsel %vm534, %v533, %v531
        %vm540 = vmand %vm309, %vm311
        %vm541 = vmand %vm310, %vm312
        %v542 = vsel %vm540, 1, 0
        %v543 = vsel %vm541, 1, 0
        %vm544 = vcmp.eq.s32.totalorder %v542, 1
        %vm545 = vcmp.eq.s32.totalorder %v543, 1
        %v546 = vsel %vm544, %v535, 0.0
        %v547 = vsel %vm545, %v539, 0.0
        %548 = vrot.lane.b32.xlu0 %v278, 112
        %v549 = vpop.permute.xlu0 %548
        %550 = vrot.lane.b32.xlu0 %v279, 112
        %v551 = vpop.permute.xlu0 %550
        %vm552 = vcmask 916480
        %v553 = vsel %vm552, %v549, %v551
        %v557 = vsel %vm552, %v551, %v549
        %v558 = vsel %vm309, 1, 0
        %v559 = vsel %vm310, 1, 0
        %vm560 = vcmp.eq.s32.totalorder %v558, 1
        %vm561 = vcmp.eq.s32.totalorder %v559, 1
        %v562 = vsel %vm560, %v553, 0.0
        %v563 = vsel %vm561, %v557, 0.0
        %564 = vrot.lane.b32.xlu0 %v278, 111
        %v565 = vpop.permute.xlu0 %564
        %566 = vrot.lane.b32.xlu0 %v279, 111
        %v567 = vpop.permute.xlu0 %566
        %vm568 = vcmask 908288
        %v569 = vsel %vm568, %v565, %v567
        %v573 = vsel %vm568, %v567, %v565
        %vm574 = vmand %vm309, %vm313
        %vm575 = vmand %vm310, %vm314
        %v576 = vsel %vm574, 1, 0
        %v577 = vsel %vm575, 1, 0
        %vm578 = vcmp.eq.s32.totalorder %v576, 1
        %vm579 = vcmp.eq.s32.totalorder %v577, 1
        %v580 = vsel %vm578, %v569, 0.0
        %v581 = vsel %vm579, %v573, 0.0
        %v582 = vpack.c.bf16 %v562, %v546
        %v583 = vpack.c.bf16 %v563, %v547
        %v584 = vpack.c.bf16 %v580, %v580
        %v585 = vpack.c.bf16 %v581, %v581
        %s586 = scalar_lea.vmem %s1, 16
        %v587 = vld [vmem:[%s586] sm:$0xf]
        %v588 = vld [vmem:[%s586 + $0x4] sm:$0xf]
        %v591 = vunpack.c.l.b16 %v587
        %v592 = vunpack.c.l.b16 %v588
        %v593 = vpack.c.b16 %v592, %v591
        %v595 = vsel %vm419, %v593, 0
        %v598 = vsel %vm423, %v584, 0
        %v601 = vsel %vm423, %v585, 0
        %603 = vmatprep.subr.bf16.mxu0 0
        %604 = vmatpush1.bf16.msra.mxu0 0
        %605 = vmatprep.subr.bf16.mxu0 0
        %606 = vmatpush1.bf16.msra.mxu0 0
        %607 = vmatprep.subr.bf16.mxu0 0
        %608 = vmatpush1.bf16.msra.mxu0 0
        %609 = vmatprep.subr.bf16.mxu0 0
        %610 = vmatpush1.bf16.msra.mxu0 0
        %611 = vmatprep.subr.bf16.mxu0 0
        %612 = vmatpush1.bf16.msra.mxu0 0
        %613 = vmatprep.subr.bf16.mxu0 0
        %614 = vmatpush1.bf16.msra.mxu0 0
        %615 = vmatprep.subr.bf16.mxu0 %v601
        %616 = vmatpush1.bf16.msra.mxu0 %v598
        %617 = vmatprep.subr.bf16.mxu0 %v583
        %618 = vmatpush1.bf16.msra.mxu0 %v582
        %619 = vmatprep.subr.bf16.mxu0 0
        %620 = vmatpush2.bf16.msra.mxu0 0
        %621 = vmatprep.subr.bf16.mxu0 0
        %622 = vmatpush2.bf16.msra.mxu0 0
        %623 = vmatprep.subr.bf16.mxu0 0
        %624 = vmatpush2.bf16.msra.mxu0 0
        %625 = vmatprep.subr.bf16.mxu0 0
        %626 = vmatpush2.bf16.msra.mxu0 0
        %627 = vmatprep.subr.bf16.mxu0 0
        %628 = vmatpush2.bf16.msra.mxu0 0
        %629 = vmatprep.subr.bf16.mxu0 0
        %630 = vmatpush2.bf16.msra.mxu0 0
        %631 = vmatprep.subr.bf16.mxu0 0
        %632 = vmatpush2.bf16.msra.mxu0 0
        %633 = vmatprep.subr.bf16.mxu0 0
        %634 = vmatpush2.bf16.msra.mxu0 0
        %635 = vmatprep.mubr.bf16.mxu0 0
        %636 = vmatmul.mubr.bf16.gmra.mxu0 %v595
        %v637 = vpop.f32.mrf.mxu0
        %v638 = vadd.f32 0.0, %v637
        %v639 = vpop.f32.mrf.mxu0
        %v640 = vadd.f32 0.0, %v639
        %v641 = vpop.f32.mrf.mxu0
        %v642 = vadd.f32 0.0, %v641
        %v643 = vpop.f32.mrf.mxu0
        %v644 = vadd.f32 0.0, %v643
        %645 = vdwg.mxu0
        %v646 = vadd.f32 %v522, %v638
        %v647 = vadd.f32 %v524, %v640
        %v648 = vadd.f32 %v526, %v642
        %v649 = vadd.f32 %v528, %v644
        %v650 = vld [vmem:[%s2] sm:$0xff]
        %v651 = vld [vmem:[%s2 + $0x8] sm:$0xff]
        %653 = vset.pattern.permute.xlu0 0
        %654 = vperm.xlu0 %653, %v650
        %v655 = vpop.permute.xlu0 %654
        %658 = vset.pattern.permute.xlu0 0
        %659 = vperm.xlu0 %658, %v651
        %v660 = vpop.permute.xlu0 %659
        %v662 = vadd.f32 %v646, %v655
        %v663 = vadd.f32 %v647, %v655
        %v664 = vadd.f32 %v648, %v660
        %v665 = vadd.f32 %v649, %v660
        %v666 = vmax.f32 %v662, 0.0
        %v667 = vmax.f32 %v663, 0.0
        %v668 = vmax.f32 %v664, 0.0
        %v669 = vmax.f32 %v665, 0.0
        %672 = vrot.lane.b32.xlu0 %v667, 17
        %v673 = vpop.permute.xlu0 %672
        %674 = vrot.lane.b32.xlu0 %v669, 17
        %v675 = vpop.permute.xlu0 %674
        %680 = vrot.lane.b32.xlu0 %v666, 17
        %v681 = vpop.permute.xlu0 %680
        %682 = vrot.lane.b32.xlu0 %v668, 17
        %v683 = vpop.permute.xlu0 %682
        %v684 = vsel %vm322, %v681, %v673
        %v685 = vsel %vm322, %v683, %v675
        %v690 = vsel %vm322, %v673, %v681
        %v691 = vsel %vm322, %v675, %v683
        %v692 = vsel %vm331, %v690, 0.0
        %v693 = vsel %vm332, %v684, 0.0
        %v694 = vsel %vm331, %v691, 0.0
        %v695 = vsel %vm332, %v685, 0.0
        %696 = vrot.lane.b32.xlu0 %v667, 16
        %v697 = vpop.permute.xlu0 %696
        %698 = vrot.lane.b32.xlu0 %v669, 16
        %v699 = vpop.permute.xlu0 %698
        %702 = vrot.lane.b32.xlu0 %v666, 16
        %v703 = vpop.permute.xlu0 %702
        %704 = vrot.lane.b32.xlu0 %v668, 16
        %v705 = vpop.permute.xlu0 %704
        %v706 = vsel %vm340, %v703, %v697
        %v707 = vsel %vm340, %v705, %v699
        %v712 = vsel %vm340, %v697, %v703
        %v713 = vsel %vm340, %v699, %v705
        %v714 = vsel %vm347, %v712, 0.0
        %v715 = vsel %vm348, %v706, 0.0
        %v716 = vsel %vm347, %v713, 0.0
        %v717 = vsel %vm348, %v707, 0.0
        %718 = vrot.lane.b32.xlu0 %v667, 15
        %v719 = vpop.permute.xlu0 %718
        %720 = vrot.lane.b32.xlu0 %v669, 15
        %v721 = vpop.permute.xlu0 %720
        %724 = vrot.lane.b32.xlu0 %v666, 15
        %v725 = vpop.permute.xlu0 %724
        %726 = vrot.lane.b32.xlu0 %v668, 15
        %v727 = vpop.permute.xlu0 %726
        %v728 = vsel %vm356, %v725, %v719
        %v729 = vsel %vm356, %v727, %v721
        %v734 = vsel %vm356, %v719, %v725
        %v735 = vsel %vm356, %v721, %v727
        %v736 = vsel %vm365, %v734, 0.0
        %v737 = vsel %vm366, %v728, 0.0
        %v738 = vsel %vm365, %v735, 0.0
        %v739 = vsel %vm366, %v729, 0.0
        %v740 = vpack.c.bf16 %v694, %v692
        %v741 = vpack.c.bf16 %v695, %v693
        %v742 = vpack.c.bf16 %v716, %v714
        %v743 = vpack.c.bf16 %v717, %v715
        %v744 = vpack.c.bf16 %v738, %v736
        %v745 = vpack.c.bf16 %v739, %v737
        %v746 = vld [vmem:[#allocation5] sm:$0xf]
        %v747 = vld [vmem:[#allocation5 + $0x4] sm:$0xf]
        %748 = vrot.lane.b32.xlu0 %v667, 1
        %v749 = vpop.permute.xlu0 %748
        %750 = vrot.lane.b32.xlu0 %v669, 1
        %v751 = vpop.permute.xlu0 %750
        %754 = vrot.lane.b32.xlu0 %v666, 1
        %v755 = vpop.permute.xlu0 %754
        %756 = vrot.lane.b32.xlu0 %v668, 1
        %v757 = vpop.permute.xlu0 %756
        %v758 = vsel %vm380, %v755, %v749
        %v759 = vsel %vm380, %v757, %v751
        %v764 = vsel %vm380, %v749, %v755
        %v765 = vsel %vm380, %v751, %v757
        %v766 = vsel %vm387, %v764, 0.0
        %v767 = vsel %vm388, %v758, 0.0
        %v768 = vsel %vm387, %v765, 0.0
        %v769 = vsel %vm388, %v759, 0.0
        %770 = vrot.lane.b32.xlu0 %v666, 127
        %v771 = vpop.permute.xlu0 %770
        %772 = vrot.lane.b32.xlu0 %v667, 127
        %v773 = vpop.permute.xlu0 %772
        %774 = vrot.lane.b32.xlu0 %v668, 127
        %v775 = vpop.permute.xlu0 %774
        %776 = vrot.lane.b32.xlu0 %v669, 127
        %v777 = vpop.permute.xlu0 %776
        %v778 = vsel %vm395, %v771, %v773
        %v779 = vsel %vm395, %v775, %v777
        %v786 = vsel %vm395, %v773, %v771
        %v787 = vsel %vm395, %v777, %v775
        %v788 = vsel %vm403, %v778, 0.0
        %v789 = vsel %vm404, %v786, 0.0
        %v790 = vsel %vm403, %v779, 0.0
        %v791 = vsel %vm404, %v787, 0.0
        %v792 = vpack.c.bf16 %v768, %v766
        %v793 = vpack.c.bf16 %v769, %v767
        %v794 = vpack.c.bf16 %v668, %v666
        %v795 = vpack.c.bf16 %v669, %v667
        %v796 = vpack.c.bf16 %v790, %v788
        %v797 = vpack.c.bf16 %v791, %v789
        %s798 = scalar_lea.vmem [#allocation5], 8
        %v799 = vld [vmem:[%s798] sm:$0xf]
        %v800 = vld [vmem:[%s798 + $0x4] sm:$0xf]
        %v803 = vunpack.c.l.b16 %v799
        %v804 = vunpack.c.l.b16 %v800
        %v805 = vpack.c.b16 %v804, %v803
        %vm806 = vcmask 392192
        %v808 = vsel %vm806, %v805, 0
        %810 = vmatprep.subr.bf16.mxu0 0
        %811 = vmatpush1.bf16.msra.mxu0 0
        %812 = vmatprep.subr.bf16.mxu0 0
        %813 = vmatpush1.bf16.msra.mxu0 0
        %814 = vmatprep.subr.bf16.mxu0 0
        %815 = vmatpush1.bf16.msra.mxu0 0
        %816 = vmatprep.subr.bf16.mxu0 0
        %817 = vmatpush1.bf16.msra.mxu0 0
        %818 = vmatprep.subr.bf16.mxu0 0
        %819 = vmatpush1.bf16.msra.mxu0 0
        %820 = vmatprep.subr.bf16.mxu0 %v797
        %821 = vmatpush1.bf16.msra.mxu0 %v796
        %822 = vmatprep.subr.bf16.mxu0 %v795
        %823 = vmatpush1.bf16.msra.mxu0 %v794
        %824 = vmatprep.subr.bf16.mxu0 %v793
        %825 = vmatpush1.bf16.msra.mxu0 %v792
        %826 = vmatprep.subr.bf16.mxu0 0
        %827 = vmatpush2.bf16.msra.mxu0 0
        %828 = vmatprep.subr.bf16.mxu0 0
        %829 = vmatpush2.bf16.msra.mxu0 0
        %830 = vmatprep.subr.bf16.mxu0 0
        %831 = vmatpush2.bf16.msra.mxu0 0
        %832 = vmatprep.subr.bf16.mxu0 0
        %833 = vmatpush2.bf16.msra.mxu0 0
        %834 = vmatprep.subr.bf16.mxu0 0
        %835 = vmatpush2.bf16.msra.mxu0 0
        %836 = vmatprep.subr.bf16.mxu0 0
        %837 = vmatpush2.bf16.msra.mxu0 0
        %838 = vmatprep.subr.bf16.mxu0 0
        %839 = vmatpush2.bf16.msra.mxu0 0
        %840 = vmatprep.subr.bf16.mxu0 0
        %841 = vmatpush2.bf16.msra.mxu0 0
        %842 = vmatprep.mubr.bf16.mxu0 0
        %843 = vmatmul.mubr.bf16.gmra.mxu0 %v808
        %v844 = vpop.f32.mrf.mxu0
        %v845 = vadd.f32 0.0, %v844
        %v846 = vpop.f32.mrf.mxu0
        %v847 = vadd.f32 0.0, %v846
        %v848 = vpop.f32.mrf.mxu0
        %v849 = vadd.f32 0.0, %v848
        %v850 = vpop.f32.mrf.mxu0
        %v851 = vadd.f32 0.0, %v850
        %852 = vdwg.mxu0
        %v855 = vunpack.c.l.b16 %v746
        %v856 = vunpack.c.l.b16 %v747
        %v857 = vpack.c.b16 %v856, %v855
        %v859 = vsel %vm806, %v857, 0
        %861 = vmatprep.subr.bf16.mxu0 0
        %862 = vmatpush1.bf16.msra.mxu0 0
        %863 = vmatprep.subr.bf16.mxu0 0
        %864 = vmatpush1.bf16.msra.mxu0 0
        %865 = vmatprep.subr.bf16.mxu0 0
        %866 = vmatpush1.bf16.msra.mxu0 0
        %867 = vmatprep.subr.bf16.mxu0 0
        %868 = vmatpush1.bf16.msra.mxu0 0
        %869 = vmatprep.subr.bf16.mxu0 0
        %870 = vmatpush1.bf16.msra.mxu0 0
        %871 = vmatprep.subr.bf16.mxu0 %v745
        %872 = vmatpush1.bf16.msra.mxu0 %v744
        %873 = vmatprep.subr.bf16.mxu0 %v743
        %874 = vmatpush1.bf16.msra.mxu0 %v742
        %875 = vmatprep.subr.bf16.mxu0 %v741
        %876 = vmatpush1.bf16.msra.mxu0 %v740
        %877 = vmatprep.subr.bf16.mxu0 0
        %878 = vmatpush2.bf16.msra.mxu0 0
        %879 = vmatprep.subr.bf16.mxu0 0
        %880 = vmatpush2.bf16.msra.mxu0 0
        %881 = vmatprep.subr.bf16.mxu0 0
        %882 = vmatpush2.bf16.msra.mxu0 0
        %883 = vmatprep.subr.bf16.mxu0 0
        %884 = vmatpush2.bf16.msra.mxu0 0
        %885 = vmatprep.subr.bf16.mxu0 0
        %886 = vmatpush2.bf16.msra.mxu0 0
        %887 = vmatprep.subr.bf16.mxu0 0
        %888 = vmatpush2.bf16.msra.mxu0 0
        %889 = vmatprep.subr.bf16.mxu0 0
        %890 = vmatpush2.bf16.msra.mxu0 0
        %891 = vmatprep.subr.bf16.mxu0 0
        %892 = vmatpush2.bf16.msra.mxu0 0
        %893 = vmatprep.mubr.bf16.mxu0 0
        %894 = vmatmul.mubr.bf16.gmra.mxu0 %v859
        %v895 = vpop.f32.mrf.mxu0
        %v896 = vadd.f32 %v845, %v895
        %v897 = vpop.f32.mrf.mxu0
        %v898 = vadd.f32 %v847, %v897
        %v899 = vpop.f32.mrf.mxu0
        %v900 = vadd.f32 %v849, %v899
        %v901 = vpop.f32.mrf.mxu0
        %v902 = vadd.f32 %v851, %v901
        %903 = vdwg.mxu0
        %904 = vrot.lane.b32.xlu0 %v666, 113
        %v905 = vpop.permute.xlu0 %904
        %906 = vrot.lane.b32.xlu0 %v667, 113
        %v907 = vpop.permute.xlu0 %906
        %908 = vrot.lane.b32.xlu0 %v668, 113
        %v909 = vpop.permute.xlu0 %908
        %910 = vrot.lane.b32.xlu0 %v669, 113
        %v911 = vpop.permute.xlu0 %910
        %v912 = vsel %vm534, %v905, %v907
        %v913 = vsel %vm534, %v909, %v911
        %v920 = vsel %vm534, %v907, %v905
        %v921 = vsel %vm534, %v911, %v909
        %v922 = vsel %vm544, %v912, 0.0
        %v923 = vsel %vm545, %v920, 0.0
        %v924 = vsel %vm544, %v913, 0.0
        %v925 = vsel %vm545, %v921, 0.0
        %926 = vrot.lane.b32.xlu0 %v666, 112
        %v927 = vpop.permute.xlu0 %926
        %928 = vrot.lane.b32.xlu0 %v667, 112
        %v929 = vpop.permute.xlu0 %928
        %930 = vrot.lane.b32.xlu0 %v668, 112
        %v931 = vpop.permute.xlu0 %930
        %932 = vrot.lane.b32.xlu0 %v669, 112
        %v933 = vpop.permute.xlu0 %932
        %v934 = vsel %vm552, %v927, %v929
        %v935 = vsel %vm552, %v931, %v933
        %v942 = vsel %vm552, %v929, %v927
        %v943 = vsel %vm552, %v933, %v931
        %v944 = vsel %vm560, %v934, 0.0
        %v945 = vsel %vm561, %v942, 0.0
        %v946 = vsel %vm560, %v935, 0.0
        %v947 = vsel %vm561, %v943, 0.0
        %948 = vrot.lane.b32.xlu0 %v666, 111
        %v949 = vpop.permute.xlu0 %948
        %950 = vrot.lane.b32.xlu0 %v667, 111
        %v951 = vpop.permute.xlu0 %950
        %952 = vrot.lane.b32.xlu0 %v668, 111
        %v953 = vpop.permute.xlu0 %952
        %954 = vrot.lane.b32.xlu0 %v669, 111
        %v955 = vpop.permute.xlu0 %954
        %v956 = vsel %vm568, %v949, %v951
        %v957 = vsel %vm568, %v953, %v955
        %v964 = vsel %vm568, %v951, %v949
        %v965 = vsel %vm568, %v955, %v953
        %v966 = vsel %vm578, %v956, 0.0
        %v967 = vsel %vm579, %v964, 0.0
        %v968 = vsel %vm578, %v957, 0.0
        %v969 = vsel %vm579, %v965, 0.0
        %v970 = vpack.c.bf16 %v924, %v922
        %v971 = vpack.c.bf16 %v925, %v923
        %v972 = vpack.c.bf16 %v946, %v944
        %v973 = vpack.c.bf16 %v947, %v945
        %v974 = vpack.c.bf16 %v968, %v966
        %v975 = vpack.c.bf16 %v969, %v967
        %s976 = scalar_lea.vmem [#allocation5], 16
        %v977 = vld [vmem:[%s976] sm:$0xf]
        %v978 = vld [vmem:[%s976 + $0x4] sm:$0xf]
        %v981 = vunpack.c.l.b16 %v977
        %v982 = vunpack.c.l.b16 %v978
        %v983 = vpack.c.b16 %v982, %v981
        %v985 = vsel %vm806, %v983, 0
        %987 = vmatprep.subr.bf16.mxu0 0
        %988 = vmatpush1.bf16.msra.mxu0 0
        %989 = vmatprep.subr.bf16.mxu0 0
        %990 = vmatpush1.bf16.msra.mxu0 0
        %991 = vmatprep.subr.bf16.mxu0 0
        %992 = vmatpush1.bf16.msra.mxu0 0
        %993 = vmatprep.subr.bf16.mxu0 0
        %994 = vmatpush1.bf16.msra.mxu0 0
        %995 = vmatprep.subr.bf16.mxu0 0
        %996 = vmatpush1.bf16.msra.mxu0 0
        %997 = vmatprep.subr.bf16.mxu0 %v975
        %998 = vmatpush1.bf16.msra.mxu0 %v974
        %999 = vmatprep.subr.bf16.mxu0 %v973
        %1000 = vmatpush1.bf16.msra.mxu0 %v972
        %1001 = vmatprep.subr.bf16.mxu0 %v971
        %1002 = vmatpush1.bf16.msra.mxu0 %v970
        %1003 = vmatprep.subr.bf16.mxu0 0
        %1004 = vmatpush2.bf16.msra.mxu0 0
        %1005 = vmatprep.subr.bf16.mxu0 0
        %1006 = vmatpush2.bf16.msra.mxu0 0
        %1007 = vmatprep.subr.bf16.mxu0 0
        %1008 = vmatpush2.bf16.msra.mxu0 0
        %1009 = vmatprep.subr.bf16.mxu0 0
        %1010 = vmatpush2.bf16.msra.mxu0 0
        %1011 = vmatprep.subr.bf16.mxu0 0
        %1012 = vmatpush2.bf16.msra.mxu0 0
        %1013 = vmatprep.subr.bf16.mxu0 0
        %1014 = vmatpush2.bf16.msra.mxu0 0
        %1015 = vmatprep.subr.bf16.mxu0 0
        %1016 = vmatpush2.bf16.msra.mxu0 0
        %1017 = vmatprep.subr.bf16.mxu0 0
        %1018 = vmatpush2.bf16.msra.mxu0 0
        %1019 = vmatprep.mubr.bf16.mxu0 0
        %1020 = vmatmul.mubr.bf16.gmra.mxu0 %v985
        %v1021 = vpop.f32.mrf.mxu0
        %v1022 = vadd.f32 0.0, %v1021
        %v1023 = vpop.f32.mrf.mxu0
        %v1024 = vadd.f32 0.0, %v1023
        %v1025 = vpop.f32.mrf.mxu0
        %v1026 = vadd.f32 0.0, %v1025
        %v1027 = vpop.f32.mrf.mxu0
        %v1028 = vadd.f32 0.0, %v1027
        %1029 = vdwg.mxu0
        %v1030 = vadd.f32 %v896, %v1022
        %v1031 = vadd.f32 %v898, %v1024
        %v1032 = vadd.f32 %v900, %v1026
        %v1033 = vadd.f32 %v902, %v1028
        %v1034 = vld [vmem:[%s4] sm:$0xff]
        %v1035 = vld [vmem:[%s4 + $0x8] sm:$0xff]
        %1037 = vset.pattern.permute.xlu0 0
        %1038 = vperm.xlu0 %1037, %v1034
        %v1039 = vpop.permute.xlu0 %1038
        %1042 = vset.pattern.permute.xlu0 0
        %1043 = vperm.xlu0 %1042, %v1035
        %v1044 = vpop.permute.xlu0 %1043
        %v1046 = vadd.f32 %v1030, %v1039
        %v1047 = vadd.f32 %v1031, %v1039
        %v1048 = vadd.f32 %v1032, %v1044
        %v1049 = vadd.f32 %v1033, %v1044
        %v1050 = vmax.f32 %v1046, 0.0
        %v1051 = vmax.f32 %v1047, 0.0
        %v1052 = vmax.f32 %v1048, 0.0
        %v1053 = vmax.f32 %v1049, 0.0
        %1054 = vst [vmem:[%s257] sm:$0xff] %v1050
        %1055 = vst [vmem:[%s257 + $0x8] sm:$0xff] %v1051
        %1056 = vst [vmem:[%s257 + $0x10] sm:$0xff] %v1052
        %1057 = vst [vmem:[%s257 + $0x18] sm:$0xff] %v1053
        %s1058 = sand.u32 %s141, 1
        %s1059 = scalar_lea.sflag [#allocation4], %s1058
        %s1060 = sand.u32 %s141, 1
        %s1061 = smul.addr %s1060, 32
        %s1062 = scalar_lea.vmem [#allocation7], %s1061
        // Predicated region
        $region49: #{tpu_custom_call.1} parent=39 // pred_check
          %p1063 = pneg %p151
        $region50: #{tpu_custom_call.1} parent=39 // pred_check_branch
          %1065 = sbr.rel (%p1063) target = $region52
        $region51: #{tpu_custom_call.1} parent=39 // pred_region
          %s1067 = ssub.s32 512, 512
          %1068 = vsyncadd %s1059, %s1067
          %s1069 = smul.addr %s23, 4
          %s1070 = smul.addr %s1069, 128
          %s1071 = scalar_lea.hbm %s5, %s1070
          %s1072 = sshll.u32 %s1062, 4
          %s1073 = int_to_ptr.vmem [resolvable:$true] %s1072
          %1078 = dma.vmem_to_hbm [thread:$0]  %s1073, 512, %s1071, %s1059, 256, 256, 16
        $region52: #{tpu_custom_call.1} parent=39 // pred_fallthru
          _
      $region40: #{tpu_custom_call.1} parent=5 // pred_fallthru
        _
      %p1079 = scmp.le.s32.totalorder 2, %s18
      // Predicated region
      $region53: #{tpu_custom_call.1} parent=5 // pred_check
        %p1080 = pneg %p1079
      $region54: #{tpu_custom_call.1} parent=5 // pred_check_branch
        %1082 = sbr.rel (%p1080) target = $region56
      $region55: #{tpu_custom_call.1} parent=5 // pred_region
        %s1083 = ssub.s32 %s18, 2
        // Predicated region
        $region57: #{tpu_custom_call.1} parent=55 // pred_check
          %p1084 = pneg %p157
        $region58: #{tpu_custom_call.1} parent=55 // pred_check_branch
          %1086 = sbr.rel (%p1084) target = $region60
        $region59: #{tpu_custom_call.1} parent=55 // pred_region
          %s1087 = sand.u32 %s142, 1
          %s1088 = scalar_lea.sflag [#allocation4], %s1087
          %s1089 = sand.u32 %s142, 1
          %s1090 = smul.addr %s1089, 32
          %s1091 = scalar_lea.vmem [#allocation7], %s1090
          %1092 = dma.done %s1088, 512
        $region60: #{tpu_custom_call.1} parent=55 // pred_fallthru
          _
      $region56: #{tpu_custom_call.1} parent=5 // pred_fallthru
        _
    $region6: #{tpu_custom_call.1} parent=1 // loop_footer
      %s22 = sadd.s32 1, %s18
    $region7: #{tpu_custom_call.1} parent=1 // loop_footer_branch
      %17 = sbr.rel target = $region3
    $region8: #{tpu_custom_call.1} parent=1 // loop_exit
      _
    %1093 = vsyncpa [#allocation3], 1
    %s1094 = scalar_lea.sflag [#allocation3], 1
    %1095 = vsyncpa %s1094, 1
    %1096 = vsyncpa [#allocation6], 1
    %1097 = vsyncpa [#allocation4], 1
    %s1098 = scalar_lea.sflag [#allocation4], 1
    %1099 = vsyncpa %s1098, 1

</llo_original>
